<compile_context>
chip_gen: v7x
topology: tpu7x:2x2x1
jax: 0.10.0
libtpu: 0.0.40
codegen_flags: <defaults>
</compile_context>

<pallas_src>
import functools
import math

import jax
import jax.numpy as jnp
import numpy as np
from jax.experimental import pallas as pl
from jax.experimental.pallas import tpu as pltpu

# ---------------- configuration (small, consistent with the module) ----------------
B = 2            # batch
S = 8            # sequence length (num nodes)
D = 128          # embed_dim
H = 8            # num_heads
DH = D // H      # head dim
HID = 64         # feedforward_hidden (per-expert MLP hidden)
E = 4            # num_experts
TOPK = 2
EPS = 1e-5       # InstanceNorm1d eps


# ---------------------------------- fused kernel ------------------------------------
def _fused_kernel(x_ref, wqkv_ref, bqkv_ref, wout_ref, bout_ref, g1_ref, be1_ref,
                  hmask_ref, sbias_ref, seg_ref, wgate_ref, w1_ref, b1_ref,
                  expand_ref, w2_ref, b2_ref, g2_ref, be2_ref, o_ref,
                  *, num_heads, eps):
    bt, s, d = x_ref.shape          # block of bt sequences
    n = bt * s                      # tokens in this block
    num_experts = wgate_ref.shape[-1]
    bf16 = jnp.bfloat16

    # (bt, s, d) -> (bt*s, d) is a tile-aligned (free) reshape; all big matmuls run on it.
    x = x_ref[...].reshape(n, d)                                        # (N, D) f32

    # --- fused QKV projection (bf16 operands, f32 accumulate); 1/sqrt(dh) pre-folded ---
    qkv = jnp.dot(x.astype(bf16), wqkv_ref[...],
                  preferred_element_type=jnp.float32) + bqkv_ref[...]   # (N, 3D)
    q = qkv[:, 0 * d:1 * d]
    k = qkv[:, 1 * d:2 * d]
    v = qkv[:, 2 * d:3 * d]

    # --- single masked multi-head SDPA ------------------------------------------------
    # Spread K/V to (H*N, D): row c = head*N + token, masked so only that head's 16-lane
    # slice of the embedding survives.  One sublane concatenate + one mask multiply each.
    hmask = hmask_ref[...]                                              # (H*N, D) 0/1 f32
    k_spread = jnp.concatenate([k] * num_heads, axis=0) * hmask         # (H*N, D)
    v_spread = jnp.concatenate([v] * num_heads, axis=0) * hmask         # (H*N, D)

    # ONE score matmul: scores[r, (h, t)] = Q_h[r] . K_h[t]   (contraction over D)
    scores = jax.lax.dot_general(q.astype(bf16), k_spread.astype(bf16),
                                 (((1,), (1,)), ((), ())),
                                 preferred_element_type=jnp.float32)    # (N, H*N)
    # additive mask: -1e30 on columns whose token belongs to a different sequence
    scores = scores + sbias_ref[...]
    # row-global max is constant within every per-head softmax segment -> exact stabilizer
    scores = scores - jnp.max(scores, axis=-1, keepdims=True)
    expo = jnp.exp(scores)                                              # masked cols -> 0
    # per-(row, head) denominators broadcast back to every lane of the segment (MXU)
    denom = jnp.dot(expo, seg_ref[...], preferred_element_type=jnp.float32)
    p = expo * pl.reciprocal(denom + 1e-30, approx=True)
    # ONE PV matmul; output is directly token-major, lane-dense (no head merge needed)
    attn = jnp.dot(p.astype(bf16), v_spread.astype(bf16),
                   preferred_element_type=jnp.float32)                  # (N, D)

    # --- out-projection + residual + InstanceNorm1d #1 (per-sequence stats) ------------
    h1 = (jnp.dot(attn.astype(bf16), wout_ref[...],
                  preferred_element_type=jnp.float32) + bout_ref[...] + x)
    h1 = h1.reshape(bt, s, d)
    mu1 = jnp.mean(h1, axis=1, keepdims=True)
    var1 = jnp.mean((h1 - mu1) ** 2, axis=1, keepdims=True)
    h1 = ((h1 - mu1) * jax.lax.rsqrt(var1 + eps) * g1_ref[...] + be1_ref[...]).reshape(n, d)

    # --- MoE: top-2 input-choice gating (f32 logits; exact divide for the 2-way softmax) -
    logits = jnp.dot(h1, wgate_ref[...], preferred_element_type=jnp.float32)   # (N, E)
    idx = jax.lax.broadcasted_iota(jnp.int32, logits.shape, 1)
    m1 = jnp.max(logits, axis=-1, keepdims=True)
    i1 = jnp.min(jnp.where(logits == m1, idx, num_experts), axis=-1, keepdims=True)
    mask1 = idx == i1
    masked = jnp.where(mask1, -jnp.inf, logits)
    m2 = jnp.max(masked, axis=-1, keepdims=True)
    i2 = jnp.min(jnp.where(masked == m2, idx, num_experts), axis=-1, keepdims=True)
    mask2 = idx == i2
    e2 = jnp.exp(m2 - m1)
    denom_g = 1.0 + e2
    gates = (jnp.where(mask1, 1.0, 0.0) + jnp.where(mask2, e2, 0.0)) / denom_g  # (N, E)

    # --- experts as two lane-dense matmuls; gate scaling via MXU block-expand ----------
    y1 = jnp.dot(h1.astype(bf16), w1_ref[...],
                 preferred_element_type=jnp.float32) + b1_ref[...]      # (N, E*HID)
    y1 = jnp.maximum(y1, 0.0)
    y1 = y1 * jnp.dot(gates, expand_ref[...], preferred_element_type=jnp.float32)
    moe = jnp.dot(y1.astype(bf16), w2_ref[...],
                  preferred_element_type=jnp.float32)                   # (N, D)
    moe = moe + jnp.dot(gates, b2_ref[...], preferred_element_type=jnp.float32)

    # --- residual + InstanceNorm1d #2 ---------------------------------------------------
    h2 = (moe + h1).reshape(bt, s, d)
    mu2 = jnp.mean(h2, axis=1, keepdims=True)
    var2 = jnp.mean((h2 - mu2) ** 2, axis=1, keepdims=True)
    o_ref[...] = (h2 - mu2) * jax.lax.rsqrt(var2 + eps) * g2_ref[...] + be2_ref[...]


# --------------------------------- wrapper ------------------------------------------
def _tensorcores_per_chip():
    """1 for v5e/v6e (single TC); 2 for v7x and megacore parts. Perf-only heuristic."""
    try:
        kind = jax.devices()[0].device_kind.lower()
    except Exception:
        return 1
    return 2 if any(tag in kind for tag in ("v7", "v4", "v5p")) else 1


def _attention_constants(bt, s, d, num_heads):
    """Precomputed masks for the single masked multi-head attention (depend only on shapes)."""
    n = bt * s
    hn = num_heads * n
    dh = d // num_heads
    col = jnp.arange(hn)
    # spread-slab head mask: row c = (head, token) keeps only that head's embedding lanes
    hmask = ((col // n)[:, None] == (jnp.arange(d) // dh)[None, :]).astype(jnp.float32)
    # additive score mask: query row r may only attend to columns of its own sequence
    sbias = jnp.where((jnp.arange(n) // s)[:, None] == ((col % n) // s)[None, :],
                      0.0, -1e30).astype(jnp.float32)
    # segment-sum matrix: broadcasts each per-(row, head) softmax denominator to its lanes
    seg = ((col // n)[:, None] == (col // n)[None, :]).astype(jnp.float32)
    return hmask, sbias, seg


def mha_moe_layer_forward(x, kp, *, num_blocks=None):
    bb, s, d = x.shape
    if num_blocks is None:
        nc = _tensorcores_per_chip()
        num_blocks = nc if (nc > 1 and bb % nc == 0) else 1   # grid=(1,) on v5e/v6e
    bt = bb // num_blocks
    hmask, sbias, seg = _attention_constants(bt, s, d, H)

    tok_spec = pl.BlockSpec((bt, s, d), lambda b: (b, 0, 0))
    const = lambda a: pl.BlockSpec(a.shape, lambda b: (0,) * a.ndim)

    operands = [x, kp["Wqkv_T"], kp["b_qkv"], kp["Wout_T"], kp["b_out"],
                kp["g1"], kp["be1"], hmask, sbias, seg, kp["w_gate"],
                kp["W1c"], kp["b1c"], kp["expand"], kp["W2c"], kp["b2c"],
                kp["g2"], kp["be2"]]
    in_specs = [tok_spec] + [const(a) for a in operands[1:]]

    return pl.pallas_call(
        functools.partial(_fused_kernel, num_heads=H, eps=EPS),
        grid=(num_blocks,),
        in_specs=in_specs,
        out_specs=tok_spec,
        out_shape=jax.ShapeDtypeStruct((bb, s, d), jnp.float32),
        compiler_params=pltpu.CompilerParams(dimension_semantics=("parallel",)),
    )(*operands)


def prepare_params(p):
    """One-time re-layout of the module parameters for the fused kernel:
    - fold 1/sqrt(head_dim) into the Q slice of the fused QKV weights/bias,
    - concatenate the E experts into single lane-dense weight slabs,
    - precompute the (E, E*HID) gate block-expand indicator,
    - cast heavy matmul weights to bfloat16 (MXU-native); keep norm/gate params in f32."""
    e, d, hid = p["W1"].shape
    scale = 1.0 / math.sqrt(d // H)
    wqkv = p["Wqkv_T"].at[:, :d].multiply(scale)
    bqkv = p["b_qkv"].at[:, :d].multiply(scale)
    bf = lambda a: a.astype(jnp.bfloat16)
    return {
        "Wqkv_T": bf(wqkv),
        "b_qkv": bqkv,
        "Wout_T": bf(p["Wout_T"]),
        "b_out": p["b_out"],
        "g1": p["g1"], "be1": p["be1"],
        "w_gate": p["w_gate"],
        "W1c": bf(jnp.moveaxis(p["W1"], 0, 1).reshape(d, e * hid)),     # (D, E*HID)
        "b1c": p["b1"].reshape(1, e * hid),                             # (1, E*HID)
        "expand": jnp.kron(jnp.eye(e, dtype=jnp.float32),
                           jnp.ones((1, hid), jnp.float32)),            # (E, E*HID) 0/1
        "W2c": bf(p["W2"].reshape(e * hid, d)),                         # (E*HID, D)
        "b2c": p["b2"].reshape(e, d),                                   # (E, D)
        "g2": p["g2"], "be2": p["be2"],
    }


# ------------------------------ pure-JAX reference (f32, original semantics) --------
def _inst_norm(h, gamma, beta):
    mean = jnp.mean(h, axis=1, keepdims=True)
    var = jnp.mean((h - mean) ** 2, axis=1, keepdims=True)
    return (h - mean) * jax.lax.rsqrt(var + EPS) * gamma + beta


def reference_forward(x, p):
    bb, s, d = x.shape
    dh = d // H
    qkv = x @ p["Wqkv_T"] + p["b_qkv"]
    qkv = qkv.reshape(bb, s, 3, H, dh)
    q = jnp.transpose(qkv[:, :, 0], (0, 2, 1, 3))
    k = jnp.transpose(qkv[:, :, 1], (0, 2, 1, 3))
    v = jnp.transpose(qkv[:, :, 2], (0, 2, 1, 3))
    sc = jnp.einsum("bhqd,bhkd->bhqk", q, k) / math.sqrt(dh)
    a = jax.nn.softmax(sc, axis=-1)
    o = jnp.einsum("bhqk,bhkd->bhqd", a, v)
    o = jnp.transpose(o, (0, 2, 1, 3)).reshape(bb, s, d)
    h = _inst_norm(o @ p["Wout_T"] + p["b_out"] + x, p["g1"], p["be1"])

    logits = h @ p["w_gate"]                                            # (B, S, E)
    vals, idxs = jax.lax.top_k(logits, TOPK)
    g = jax.nn.softmax(vals, axis=-1)
    gates = jnp.sum(jax.nn.one_hot(idxs, E, dtype=h.dtype) * g[..., None], axis=-2)
    out = jnp.zeros_like(h)
    for e in range(E):
        y = jnp.maximum(h @ p["W1"][e] + p["b1"][e], 0.0)
        y = y @ p["W2"][e] + p["b2"][e]
        out = out + gates[..., e:e + 1] * y
    return _inst_norm(out + h, p["g2"], p["be2"])


# ------------------------------------ main ------------------------------------------
def make_params(key):
    ks = jax.random.split(key, 12)
    w = lambda k, shape, sd=0.05: jax.random.normal(k, shape, jnp.float32) * sd
    return {
        "Wqkv_T": w(ks[0], (D, 3 * D)),
        "b_qkv": w(ks[1], (1, 3 * D)),
        "Wout_T": w(ks[2], (D, D)),
        "b_out": w(ks[3], (1, D)),
        "g1": 1.0 + w(ks[4], (1, D)),
        "be1": w(ks[5], (1, D)),
        "w_gate": w(ks[6], (D, E), 0.5),
        "W1": w(ks[7], (E, D, HID)),
        "b1": w(ks[8], (E, 1, HID)),
        "W2": w(ks[9], (E, HID, D)),
        "b2": w(ks[10], (E, 1, D)),
        "g2": 1.0 + w(ks[11], (1, D)),
        "be2": w(jax.random.fold_in(key, 99), (1, D)),
    }


if __name__ == "__main__":
    key = jax.random.PRNGKey(0)
    kx, kparam = jax.random.split(key)
    x = jax.random.normal(kx, (B, S, D), jnp.float32)
    params = make_params(kparam)
    kernel_params = prepare_params(params)

    out = jax.jit(mha_moe_layer_forward)(x, kernel_params)
    out = jax.block_until_ready(out)

    ref = reference_forward(x, params)
    # Tolerance covers bf16 MXU operands in the kernel (QKV, scores, PV, out-proj, experts)
    # plus the approximate softmax reciprocal, vs. the strictly-f32 reference.
    np.testing.assert_allclose(np.asarray(out), np.asarray(ref), rtol=3e-2, atol=3e-2)

    print("KERNEL_OK")
</pallas_src>

<mosaic_0001>
module attributes {stable_mosaic.version = 11 : i64} {
  func.func @_fused_kernel(%arg0: i32, %arg1: memref<2x8x128xf32, #tpu.memory_space<vmem>>, %arg2: memref<128x384xbf16, #tpu.memory_space<vmem>>, %arg3: memref<1x384xf32, #tpu.memory_space<vmem>>, %arg4: memref<128x128xbf16, #tpu.memory_space<vmem>>, %arg5: memref<1x128xf32, #tpu.memory_space<vmem>>, %arg6: memref<1x128xf32, #tpu.memory_space<vmem>>, %arg7: memref<1x128xf32, #tpu.memory_space<vmem>>, %arg8: memref<128x128xf32, #tpu.memory_space<vmem>>, %arg9: memref<16x128xf32, #tpu.memory_space<vmem>>, %arg10: memref<128x128xf32, #tpu.memory_space<vmem>>, %arg11: memref<128x4xf32, #tpu.memory_space<vmem>>, %arg12: memref<128x256xbf16, #tpu.memory_space<vmem>>, %arg13: memref<1x256xf32, #tpu.memory_space<vmem>>, %arg14: memref<4x256xf32, #tpu.memory_space<vmem>>, %arg15: memref<256x128xbf16, #tpu.memory_space<vmem>>, %arg16: memref<4x128xf32, #tpu.memory_space<vmem>>, %arg17: memref<1x128xf32, #tpu.memory_space<vmem>>, %arg18: memref<1x128xf32, #tpu.memory_space<vmem>>, %arg19: memref<2x8x128xf32, #tpu.memory_space<vmem>>) attributes {dimension_semantics = [#tpu.dimension_semantics<parallel>], iteration_bounds = array<i64: 1>, scalar_prefetch = 0 : i64, scratch_operands = 0 : i64, tpu.core_type = #tpu.core_type<tc>, window_params = [{transform_indices = @transform_0, window_bounds = array<i64: 2, 8, 128>}, {pipeline_mode = #tpu.pipeline_mode<synchronous>, transform_indices = @transform_1, window_bounds = array<i64: 128, 384>}, {pipeline_mode = #tpu.pipeline_mode<synchronous>, transform_indices = @transform_2, window_bounds = array<i64: 1, 384>}, {pipeline_mode = #tpu.pipeline_mode<synchronous>, transform_indices = @transform_3, window_bounds = array<i64: 128, 128>}, {pipeline_mode = #tpu.pipeline_mode<synchronous>, transform_indices = @transform_4, window_bounds = array<i64: 1, 128>}, {pipeline_mode = #tpu.pipeline_mode<synchronous>, transform_indices = @transform_5, window_bounds = array<i64: 1, 128>}, {pipeline_mode = #tpu.pipeline_mode<synchronous>, transform_indices = @transform_6, window_bounds = array<i64: 1, 128>}, {pipeline_mode = #tpu.pipeline_mode<synchronous>, transform_indices = @transform_7, window_bounds = array<i64: 128, 128>}, {pipeline_mode = #tpu.pipeline_mode<synchronous>, transform_indices = @transform_8, window_bounds = array<i64: 16, 128>}, {pipeline_mode = #tpu.pipeline_mode<synchronous>, transform_indices = @transform_9, window_bounds = array<i64: 128, 128>}, {pipeline_mode = #tpu.pipeline_mode<synchronous>, transform_indices = @transform_10, window_bounds = array<i64: 128, 4>}, {pipeline_mode = #tpu.pipeline_mode<synchronous>, transform_indices = @transform_11, window_bounds = array<i64: 128, 256>}, {pipeline_mode = #tpu.pipeline_mode<synchronous>, transform_indices = @transform_12, window_bounds = array<i64: 1, 256>}, {pipeline_mode = #tpu.pipeline_mode<synchronous>, transform_indices = @transform_13, window_bounds = array<i64: 4, 256>}, {pipeline_mode = #tpu.pipeline_mode<synchronous>, transform_indices = @transform_14, window_bounds = array<i64: 256, 128>}, {pipeline_mode = #tpu.pipeline_mode<synchronous>, transform_indices = @transform_15, window_bounds = array<i64: 4, 128>}, {pipeline_mode = #tpu.pipeline_mode<synchronous>, transform_indices = @transform_16, window_bounds = array<i64: 1, 128>}, {pipeline_mode = #tpu.pipeline_mode<synchronous>, transform_indices = @transform_17, window_bounds = array<i64: 1, 128>}, {transform_indices = @transform_18, window_bounds = array<i64: 2, 8, 128>}]} {
    %c0 = arith.constant 0 : index
    %c0_0 = arith.constant 0 : index
    %c0_1 = arith.constant 0 : index
    %0 = vector.load %arg1[%c0, %c0_0, %c0_1] : memref<2x8x128xf32, #tpu.memory_space<vmem>>, vector<2x8x128xf32>
    %1 = vector.shape_cast %0 : vector<2x8x128xf32> to vector<16x128xf32>
    %2 = arith.truncf %1 : vector<16x128xf32> to vector<16x128xbf16>
    %c0_2 = arith.constant 0 : index
    %c0_3 = arith.constant 0 : index
    %3 = vector.load %arg2[%c0_2, %c0_3] : memref<128x384xbf16, #tpu.memory_space<vmem>>, vector<128x384xbf16>
    %cst = arith.constant dense<0.000000e+00> : vector<16x384xf32>
    %4 = tpu.matmul %2, %3, %cst {dimension_numbers = #tpu.dot_dimension_numbers<[1], [0], [0], [1], [0, 0, 1, 1], [], []>} : vector<16x128xbf16>, vector<128x384xbf16>, vector<16x384xf32> -> vector<16x384xf32>
    %c0_4 = arith.constant 0 : index
    %c0_5 = arith.constant 0 : index
    %5 = vector.load %arg3[%c0_4, %c0_5] : memref<1x384xf32, #tpu.memory_space<vmem>>, vector<1x384xf32>
    %6 = vector.broadcast %5 : vector<1x384xf32> to vector<16x384xf32>
    %7 = arith.addf %4, %6 : vector<16x384xf32>
    %8 = vector.extract_strided_slice %7 {offsets = [0, 0], sizes = [16, 128], strides = [1, 1]} : vector<16x384xf32> to vector<16x128xf32>
    %9 = vector.extract_strided_slice %7 {offsets = [0, 128], sizes = [16, 128], strides = [1, 1]} : vector<16x384xf32> to vector<16x128xf32>
    %10 = vector.extract_strided_slice %7 {offsets = [0, 256], sizes = [16, 128], strides = [1, 1]} : vector<16x384xf32> to vector<16x128xf32>
    %c0_6 = arith.constant 0 : index
    %c0_7 = arith.constant 0 : index
    %11 = vector.load %arg8[%c0_6, %c0_7] : memref<128x128xf32, #tpu.memory_space<vmem>>, vector<128x128xf32>
    %12 = tpu.concatenate %9, %9, %9, %9, %9, %9, %9, %9 in 0 : vector<16x128xf32>, vector<16x128xf32>, vector<16x128xf32>, vector<16x128xf32>, vector<16x128xf32>, vector<16x128xf32>, vector<16x128xf32>, vector<16x128xf32> -> vector<128x128xf32>
    %13 = arith.mulf %12, %11 : vector<128x128xf32>
    %14 = tpu.concatenate %10, %10, %10, %10, %10, %10, %10, %10 in 0 : vector<16x128xf32>, vector<16x128xf32>, vector<16x128xf32>, vector<16x128xf32>, vector<16x128xf32>, vector<16x128xf32>, vector<16x128xf32>, vector<16x128xf32> -> vector<128x128xf32>
    %15 = arith.mulf %14, %11 : vector<128x128xf32>
    %16 = arith.truncf %8 : vector<16x128xf32> to vector<16x128xbf16>
    %17 = arith.truncf %13 : vector<128x128xf32> to vector<128x128xbf16>
    %cst_8 = arith.constant dense<0.000000e+00> : vector<16x128xf32>
    %18 = tpu.matmul %16, %17, %cst_8 {dimension_numbers = #tpu.dot_dimension_numbers<[1], [1], [0], [0], [0, 0, 1, 0], [], []>} : vector<16x128xbf16>, vector<128x128xbf16>, vector<16x128xf32> -> vector<16x128xf32>
    %c0_9 = arith.constant 0 : index
    %c0_10 = arith.constant 0 : index
    %19 = vector.load %arg9[%c0_9, %c0_10] : memref<16x128xf32, #tpu.memory_space<vmem>>, vector<16x128xf32>
    %20 = arith.addf %18, %19 : vector<16x128xf32>
    %cst_11 = arith.constant dense<0xFF800000> : vector<16xf32>
    %21 = vector.multi_reduction <maximumf>, %20, %cst_11 [1] : vector<16x128xf32> to vector<16xf32>
    %22 = vector.shape_cast %21 : vector<16xf32> to vector<16x1xf32>
    %23 = vector.broadcast %22 : vector<16x1xf32> to vector<16x128xf32>
    %24 = arith.subf %20, %23 : vector<16x128xf32>
    %25 = math.exp %24 : vector<16x128xf32>
    %c0_12 = arith.constant 0 : index
    %c0_13 = arith.constant 0 : index
    %26 = vector.load %arg10[%c0_12, %c0_13] : memref<128x128xf32, #tpu.memory_space<vmem>>, vector<128x128xf32>
    %cst_14 = arith.constant dense<0.000000e+00> : vector<16x128xf32>
    %27 = tpu.matmul %25, %26, %cst_14 {dimension_numbers = #tpu.dot_dimension_numbers<[1], [0], [0], [1], [0, 0, 1, 1], [], []>} : vector<16x128xf32>, vector<128x128xf32>, vector<16x128xf32> -> vector<16x128xf32>
    %cst_15 = arith.constant 1.000000e-30 : f32
    %28 = vector.broadcast %cst_15 : f32 to vector<16x128xf32>
    %29 = arith.addf %27, %28 : vector<16x128xf32>
    %30 = tpu.reciprocal %29 {approx = true} : vector<16x128xf32> -> vector<16x128xf32>
    %31 = arith.mulf %25, %30 : vector<16x128xf32>
    %32 = arith.truncf %31 : vector<16x128xf32> to vector<16x128xbf16>
    %33 = arith.truncf %15 : vector<128x128xf32> to vector<128x128xbf16>
    %cst_16 = arith.constant dense<0.000000e+00> : vector<16x128xf32>
    %34 = tpu.matmul %32, %33, %cst_16 {dimension_numbers = #tpu.dot_dimension_numbers<[1], [0], [0], [1], [0, 0, 1, 1], [], []>} : vector<16x128xbf16>, vector<128x128xbf16>, vector<16x128xf32> -> vector<16x128xf32>
    %35 = arith.truncf %34 : vector<16x128xf32> to vector<16x128xbf16>
    %c0_17 = arith.constant 0 : index
    %c0_18 = arith.constant 0 : index
    %36 = vector.load %arg4[%c0_17, %c0_18] : memref<128x128xbf16, #tpu.memory_space<vmem>>, vector<128x128xbf16>
    %cst_19 = arith.constant dense<0.000000e+00> : vector<16x128xf32>
    %37 = tpu.matmul %35, %36, %cst_19 {dimension_numbers = #tpu.dot_dimension_numbers<[1], [0], [0], [1], [0, 0, 1, 1], [], []>} : vector<16x128xbf16>, vector<128x128xbf16>, vector<16x128xf32> -> vector<16x128xf32>
    %c0_20 = arith.constant 0 : index
    %c0_21 = arith.constant 0 : index
    %38 = vector.load %arg5[%c0_20, %c0_21] : memref<1x128xf32, #tpu.memory_space<vmem>>, vector<1x128xf32>
    %39 = vector.broadcast %38 : vector<1x128xf32> to vector<16x128xf32>
    %40 = arith.addf %37, %39 : vector<16x128xf32>
    %41 = arith.addf %40, %1 : vector<16x128xf32>
    %42 = vector.shape_cast %41 : vector<16x128xf32> to vector<2x8x128xf32>
    %cst_22 = arith.constant dense<0.000000e+00> : vector<2x128xf32>
    %43 = vector.multi_reduction <add>, %42, %cst_22 [1] : vector<2x8x128xf32> to vector<2x128xf32>
    %44 = vector.shape_cast %43 : vector<2x128xf32> to vector<2x1x128xf32>
    %cst_23 = arith.constant 8.000000e+00 : f32
    %45 = vector.broadcast %cst_23 : f32 to vector<2x1x128xf32>
    %46 = arith.divf %44, %45 : vector<2x1x128xf32>
    %47 = vector.broadcast %46 : vector<2x1x128xf32> to vector<2x8x128xf32>
    %48 = arith.subf %42, %47 : vector<2x8x128xf32>
    %49 = arith.mulf %48, %48 : vector<2x8x128xf32>
    %cst_24 = arith.constant dense<0.000000e+00> : vector<2x128xf32>
    %50 = vector.multi_reduction <add>, %49, %cst_24 [1] : vector<2x8x128xf32> to vector<2x128xf32>
    %51 = vector.shape_cast %50 : vector<2x128xf32> to vector<2x1x128xf32>
    %cst_25 = arith.constant 8.000000e+00 : f32
    %52 = vector.broadcast %cst_25 : f32 to vector<2x1x128xf32>
    %53 = arith.divf %51, %52 : vector<2x1x128xf32>
    %54 = vector.broadcast %46 : vector<2x1x128xf32> to vector<2x8x128xf32>
    %55 = arith.subf %42, %54 : vector<2x8x128xf32>
    %cst_26 = arith.constant 9.99999974E-6 : f32
    %56 = vector.broadcast %cst_26 : f32 to vector<2x1x128xf32>
    %57 = arith.addf %53, %56 : vector<2x1x128xf32>
    %58 = math.rsqrt %57 : vector<2x1x128xf32>
    %59 = vector.broadcast %58 : vector<2x1x128xf32> to vector<2x8x128xf32>
    %60 = arith.mulf %55, %59 : vector<2x8x128xf32>
    %c0_27 = arith.constant 0 : index
    %c0_28 = arith.constant 0 : index
    %61 = vector.load %arg6[%c0_27, %c0_28] : memref<1x128xf32, #tpu.memory_space<vmem>>, vector<1x128xf32>
    %62 = vector.shape_cast %61 : vector<1x128xf32> to vector<1x1x128xf32>
    %63 = vector.broadcast %62 : vector<1x1x128xf32> to vector<2x8x128xf32>
    %64 = arith.mulf %60, %63 : vector<2x8x128xf32>
    %c0_29 = arith.constant 0 : index
    %c0_30 = arith.constant 0 : index
    %65 = vector.load %arg7[%c0_29, %c0_30] : memref<1x128xf32, #tpu.memory_space<vmem>>, vector<1x128xf32>
    %66 = vector.shape_cast %65 : vector<1x128xf32> to vector<1x1x128xf32>
    %67 = vector.broadcast %66 : vector<1x1x128xf32> to vector<2x8x128xf32>
    %68 = arith.addf %64, %67 : vector<2x8x128xf32>
    %69 = vector.shape_cast %68 : vector<2x8x128xf32> to vector<16x128xf32>
    %c0_31 = arith.constant 0 : index
    %c0_32 = arith.constant 0 : index
    %70 = vector.load %arg11[%c0_31, %c0_32] : memref<128x4xf32, #tpu.memory_space<vmem>>, vector<128x4xf32>
    %cst_33 = arith.constant dense<0.000000e+00> : vector<16x4xf32>
    %71 = tpu.matmul %69, %70, %cst_33 {dimension_numbers = #tpu.dot_dimension_numbers<[1], [0], [0], [1], [0, 0, 1, 1], [], []>} : vector<16x128xf32>, vector<128x4xf32>, vector<16x4xf32> -> vector<16x4xf32>
    %72 = tpu.iota {dimensions = array<i32: 1>} : vector<16x4xi32>
    %cst_34 = arith.constant dense<0xFF800000> : vector<16xf32>
    %73 = vector.multi_reduction <maximumf>, %71, %cst_34 [1] : vector<16x4xf32> to vector<16xf32>
    %74 = vector.shape_cast %73 : vector<16xf32> to vector<16x1xf32>
    %75 = vector.broadcast %74 : vector<16x1xf32> to vector<16x4xf32>
    %76 = arith.cmpf oeq, %71, %75 : vector<16x4xf32>
    %c4_i32 = arith.constant 4 : i32
    %77 = vector.broadcast %c4_i32 : i32 to vector<16x4xi32>
    %78 = arith.select %76, %72, %77 : vector<16x4xi1>, vector<16x4xi32>
    %cst_35 = arith.constant dense<2147483647> : vector<16xi32>
    %79 = vector.multi_reduction <minsi>, %78, %cst_35 [1] : vector<16x4xi32> to vector<16xi32>
    %80 = vector.shape_cast %79 : vector<16xi32> to vector<16x1xi32>
    %81 = vector.broadcast %80 : vector<16x1xi32> to vector<16x4xi32>
    %82 = arith.cmpi eq, %72, %81 : vector<16x4xi32>
    %cst_36 = arith.constant 0xFF800000 : f32
    %83 = vector.broadcast %cst_36 : f32 to vector<16x4xf32>
    %84 = arith.select %82, %83, %71 : vector<16x4xi1>, vector<16x4xf32>
    %cst_37 = arith.constant dense<0xFF800000> : vector<16xf32>
    %85 = vector.multi_reduction <maximumf>, %84, %cst_37 [1] : vector<16x4xf32> to vector<16xf32>
    %86 = vector.shape_cast %85 : vector<16xf32> to vector<16x1xf32>
    %87 = vector.broadcast %86 : vector<16x1xf32> to vector<16x4xf32>
    %88 = arith.cmpf oeq, %84, %87 : vector<16x4xf32>
    %c4_i32_38 = arith.constant 4 : i32
    %89 = vector.broadcast %c4_i32_38 : i32 to vector<16x4xi32>
    %90 = arith.select %88, %72, %89 : vector<16x4xi1>, vector<16x4xi32>
    %cst_39 = arith.constant dense<2147483647> : vector<16xi32>
    %91 = vector.multi_reduction <minsi>, %90, %cst_39 [1] : vector<16x4xi32> to vector<16xi32>
    %92 = vector.shape_cast %91 : vector<16xi32> to vector<16x1xi32>
    %93 = vector.broadcast %92 : vector<16x1xi32> to vector<16x4xi32>
    %94 = arith.cmpi eq, %72, %93 : vector<16x4xi32>
    %95 = arith.subf %86, %74 : vector<16x1xf32>
    %96 = math.exp %95 : vector<16x1xf32>
    %cst_40 = arith.constant 1.000000e+00 : f32
    %97 = vector.broadcast %cst_40 : f32 to vector<16x1xf32>
    %98 = arith.addf %97, %96 : vector<16x1xf32>
    %cst_41 = arith.constant 1.000000e+00 : f32
    %cst_42 = arith.constant 0.000000e+00 : f32
    %99 = vector.broadcast %cst_41 : f32 to vector<16x4xf32>
    %100 = vector.broadcast %cst_42 : f32 to vector<16x4xf32>
    %101 = arith.select %82, %99, %100 : vector<16x4xi1>, vector<16x4xf32>
    %cst_43 = arith.constant 0.000000e+00 : f32
    %102 = vector.shape_cast %96 : vector<16x1xf32> to vector<16x1xf32>
    %103 = vector.broadcast %102 : vector<16x1xf32> to vector<16x4xf32>
    %104 = vector.broadcast %cst_43 : f32 to vector<16x4xf32>
    %105 = arith.select %94, %103, %104 : vector<16x4xi1>, vector<16x4xf32>
    %106 = arith.addf %101, %105 : vector<16x4xf32>
    %107 = vector.broadcast %98 : vector<16x1xf32> to vector<16x4xf32>
    %108 = arith.divf %106, %107 : vector<16x4xf32>
    %109 = arith.truncf %69 : vector<16x128xf32> to vector<16x128xbf16>
    %c0_44 = arith.constant 0 : index
    %c0_45 = arith.constant 0 : index
    %110 = vector.load %arg12[%c0_44, %c0_45] : memref<128x256xbf16, #tpu.memory_space<vmem>>, vector<128x256xbf16>
    %cst_46 = arith.constant dense<0.000000e+00> : vector<16x256xf32>
    %111 = tpu.matmul %109, %110, %cst_46 {dimension_numbers = #tpu.dot_dimension_numbers<[1], [0], [0], [1], [0, 0, 1, 1], [], []>} : vector<16x128xbf16>, vector<128x256xbf16>, vector<16x256xf32> -> vector<16x256xf32>
    %c0_47 = arith.constant 0 : index
    %c0_48 = arith.constant 0 : index
    %112 = vector.load %arg13[%c0_47, %c0_48] : memref<1x256xf32, #tpu.memory_space<vmem>>, vector<1x256xf32>
    %113 = vector.broadcast %112 : vector<1x256xf32> to vector<16x256xf32>
    %114 = arith.addf %111, %113 : vector<16x256xf32>
    %cst_49 = arith.constant 0.000000e+00 : f32
    %115 = vector.broadcast %cst_49 : f32 to vector<16x256xf32>
    %116 = arith.maximumf %114, %115 : vector<16x256xf32>
    %c0_50 = arith.constant 0 : index
    %c0_51 = arith.constant 0 : index
    %117 = vector.load %arg14[%c0_50, %c0_51] : memref<4x256xf32, #tpu.memory_space<vmem>>, vector<4x256xf32>
    %cst_52 = arith.constant dense<0.000000e+00> : vector<16x256xf32>
    %118 = tpu.matmul %108, %117, %cst_52 {dimension_numbers = #tpu.dot_dimension_numbers<[1], [0], [0], [1], [0, 0, 1, 1], [], []>} : vector<16x4xf32>, vector<4x256xf32>, vector<16x256xf32> -> vector<16x256xf32>
    %119 = arith.mulf %116, %118 : vector<16x256xf32>
    %120 = arith.truncf %119 : vector<16x256xf32> to vector<16x256xbf16>
    %c0_53 = arith.constant 0 : index
    %c0_54 = arith.constant 0 : index
    %121 = vector.load %arg15[%c0_53, %c0_54] : memref<256x128xbf16, #tpu.memory_space<vmem>>, vector<256x128xbf16>
    %cst_55 = arith.constant dense<0.000000e+00> : vector<16x128xf32>
    %122 = tpu.matmul %120, %121, %cst_55 {dimension_numbers = #tpu.dot_dimension_numbers<[1], [0], [0], [1], [0, 0, 1, 1], [], []>} : vector<16x256xbf16>, vector<256x128xbf16>, vector<16x128xf32> -> vector<16x128xf32>
    %c0_56 = arith.constant 0 : index
    %c0_57 = arith.constant 0 : index
    %123 = vector.load %arg16[%c0_56, %c0_57] : memref<4x128xf32, #tpu.memory_space<vmem>>, vector<4x128xf32>
    %cst_58 = arith.constant dense<0.000000e+00> : vector<16x128xf32>
    %124 = tpu.matmul %108, %123, %cst_58 {dimension_numbers = #tpu.dot_dimension_numbers<[1], [0], [0], [1], [0, 0, 1, 1], [], []>} : vector<16x4xf32>, vector<4x128xf32>, vector<16x128xf32> -> vector<16x128xf32>
    %125 = arith.addf %122, %124 : vector<16x128xf32>
    %126 = arith.addf %125, %69 : vector<16x128xf32>
    %127 = vector.shape_cast %126 : vector<16x128xf32> to vector<2x8x128xf32>
    %cst_59 = arith.constant dense<0.000000e+00> : vector<2x128xf32>
    %128 = vector.multi_reduction <add>, %127, %cst_59 [1] : vector<2x8x128xf32> to vector<2x128xf32>
    %129 = vector.shape_cast %128 : vector<2x128xf32> to vector<2x1x128xf32>
    %cst_60 = arith.constant 8.000000e+00 : f32
    %130 = vector.broadcast %cst_60 : f32 to vector<2x1x128xf32>
    %131 = arith.divf %129, %130 : vector<2x1x128xf32>
    %132 = vector.broadcast %131 : vector<2x1x128xf32> to vector<2x8x128xf32>
    %133 = arith.subf %127, %132 : vector<2x8x128xf32>
    %134 = arith.mulf %133, %133 : vector<2x8x128xf32>
    %cst_61 = arith.constant dense<0.000000e+00> : vector<2x128xf32>
    %135 = vector.multi_reduction <add>, %134, %cst_61 [1] : vector<2x8x128xf32> to vector<2x128xf32>
    %136 = vector.shape_cast %135 : vector<2x128xf32> to vector<2x1x128xf32>
    %cst_62 = arith.constant 8.000000e+00 : f32
    %137 = vector.broadcast %cst_62 : f32 to vector<2x1x128xf32>
    %138 = arith.divf %136, %137 : vector<2x1x128xf32>
    %139 = vector.broadcast %131 : vector<2x1x128xf32> to vector<2x8x128xf32>
    %140 = arith.subf %127, %139 : vector<2x8x128xf32>
    %cst_63 = arith.constant 9.99999974E-6 : f32
    %141 = vector.broadcast %cst_63 : f32 to vector<2x1x128xf32>
    %142 = arith.addf %138, %141 : vector<2x1x128xf32>
    %143 = math.rsqrt %142 : vector<2x1x128xf32>
    %144 = vector.broadcast %143 : vector<2x1x128xf32> to vector<2x8x128xf32>
    %145 = arith.mulf %140, %144 : vector<2x8x128xf32>
    %c0_64 = arith.constant 0 : index
    %c0_65 = arith.constant 0 : index
    %146 = vector.load %arg17[%c0_64, %c0_65] : memref<1x128xf32, #tpu.memory_space<vmem>>, vector<1x128xf32>
    %147 = vector.shape_cast %146 : vector<1x128xf32> to vector<1x1x128xf32>
    %148 = vector.broadcast %147 : vector<1x1x128xf32> to vector<2x8x128xf32>
    %149 = arith.mulf %145, %148 : vector<2x8x128xf32>
    %c0_66 = arith.constant 0 : index
    %c0_67 = arith.constant 0 : index
    %150 = vector.load %arg18[%c0_66, %c0_67] : memref<1x128xf32, #tpu.memory_space<vmem>>, vector<1x128xf32>
    %151 = vector.shape_cast %150 : vector<1x128xf32> to vector<1x1x128xf32>
    %152 = vector.broadcast %151 : vector<1x1x128xf32> to vector<2x8x128xf32>
    %153 = arith.addf %149, %152 : vector<2x8x128xf32>
    %c0_68 = arith.constant 0 : index
    %c0_69 = arith.constant 0 : index
    %c0_70 = arith.constant 0 : index
    %154 = vector.load %arg19[%c0_68, %c0_69, %c0_70] : memref<2x8x128xf32, #tpu.memory_space<vmem>>, vector<2x8x128xf32>
    tpu.vector_store %arg19[%c0_68, %c0_69, %c0_70], %153 {strides = array<i32>} : memref<2x8x128xf32, #tpu.memory_space<vmem>>, vector<2x8x128xf32>,
    return
  }
  func.func @transform_0(%arg0: i32) -> (i32, i32, i32) {
    %c0_i32 = arith.constant 0 : i32
    %c0_i32_0 = arith.constant 0 : i32
    %c0_i32_1 = arith.constant 0 : i32
    return %arg0, %c0_i32, %c0_i32_0 : i32, i32, i32
  }
  func.func @transform_1(%arg0: i32) -> (i32, i32) {
    %c0_i32 = arith.constant 0 : i32
    %c0_i32_0 = arith.constant 0 : i32
    %c0_i32_1 = arith.constant 0 : i32
    return %c0_i32, %c0_i32_0 : i32, i32
  }
  func.func @transform_2(%arg0: i32) -> (i32, i32) {
    %c0_i32 = arith.constant 0 : i32
    %c0_i32_0 = arith.constant 0 : i32
    %c0_i32_1 = arith.constant 0 : i32
    return %c0_i32, %c0_i32_0 : i32, i32
  }
  func.func @transform_3(%arg0: i32) -> (i32, i32) {
    %c0_i32 = arith.constant 0 : i32
    %c0_i32_0 = arith.constant 0 : i32
    %c0_i32_1 = arith.constant 0 : i32
    return %c0_i32, %c0_i32_0 : i32, i32
  }
  func.func @transform_4(%arg0: i32) -> (i32, i32) {
    %c0_i32 = arith.constant 0 : i32
    %c0_i32_0 = arith.constant 0 : i32
    %c0_i32_1 = arith.constant 0 : i32
    return %c0_i32, %c0_i32_0 : i32, i32
  }
  func.func @transform_5(%arg0: i32) -> (i32, i32) {
    %c0_i32 = arith.constant 0 : i32
    %c0_i32_0 = arith.constant 0 : i32
    %c0_i32_1 = arith.constant 0 : i32
    return %c0_i32, %c0_i32_0 : i32, i32
  }
  func.func @transform_6(%arg0: i32) -> (i32, i32) {
    %c0_i32 = arith.constant 0 : i32
    %c0_i32_0 = arith.constant 0 : i32
    %c0_i32_1 = arith.constant 0 : i32
    return %c0_i32, %c0_i32_0 : i32, i32
  }
  func.func @transform_7(%arg0: i32) -> (i32, i32) {
    %c0_i32 = arith.constant 0 : i32
    %c0_i32_0 = arith.constant 0 : i32
    %c0_i32_1 = arith.constant 0 : i32
    return %c0_i32, %c0_i32_0 : i32, i32
  }
  func.func @transform_8(%arg0: i32) -> (i32, i32) {
    %c0_i32 = arith.constant 0 : i32
    %c0_i32_0 = arith.constant 0 : i32
    %c0_i32_1 = arith.constant 0 : i32
    return %c0_i32, %c0_i32_0 : i32, i32
  }
  func.func @transform_9(%arg0: i32) -> (i32, i32) {
    %c0_i32 = arith.constant 0 : i32
    %c0_i32_0 = arith.constant 0 : i32
    %c0_i32_1 = arith.constant 0 : i32
    return %c0_i32, %c0_i32_0 : i32, i32
  }
  func.func @transform_10(%arg0: i32) -> (i32, i32) {
    %c0_i32 = arith.constant 0 : i32
    %c0_i32_0 = arith.constant 0 : i32
    %c0_i32_1 = arith.constant 0 : i32
    return %c0_i32, %c0_i32_0 : i32, i32
  }
  func.func @transform_11(%arg0: i32) -> (i32, i32) {
    %c0_i32 = arith.constant 0 : i32
    %c0_i32_0 = arith.constant 0 : i32
    %c0_i32_1 = arith.constant 0 : i32
    return %c0_i32, %c0_i32_0 : i32, i32
  }
  func.func @transform_12(%arg0: i32) -> (i32, i32) {
    %c0_i32 = arith.constant 0 : i32
    %c0_i32_0 = arith.constant 0 : i32
    %c0_i32_1 = arith.constant 0 : i32
    return %c0_i32, %c0_i32_0 : i32, i32
  }
  func.func @transform_13(%arg0: i32) -> (i32, i32) {
    %c0_i32 = arith.constant 0 : i32
    %c0_i32_0 = arith.constant 0 : i32
    %c0_i32_1 = arith.constant 0 : i32
    return %c0_i32, %c0_i32_0 : i32, i32
  }
  func.func @transform_14(%arg0: i32) -> (i32, i32) {
    %c0_i32 = arith.constant 0 : i32
    %c0_i32_0 = arith.constant 0 : i32
    %c0_i32_1 = arith.constant 0 : i32
    return %c0_i32, %c0_i32_0 : i32, i32
  }
  func.func @transform_15(%arg0: i32) -> (i32, i32) {
    %c0_i32 = arith.constant 0 : i32
    %c0_i32_0 = arith.constant 0 : i32
    %c0_i32_1 = arith.constant 0 : i32
    return %c0_i32, %c0_i32_0 : i32, i32
  }
  func.func @transform_16(%arg0: i32) -> (i32, i32) {
    %c0_i32 = arith.constant 0 : i32
    %c0_i32_0 = arith.constant 0 : i32
    %c0_i32_1 = arith.constant 0 : i32
    return %c0_i32, %c0_i32_0 : i32, i32
  }
  func.func @transform_17(%arg0: i32) -> (i32, i32) {
    %c0_i32 = arith.constant 0 : i32
    %c0_i32_0 = arith.constant 0 : i32
    %c0_i32_1 = arith.constant 0 : i32
    return %c0_i32, %c0_i32_0 : i32, i32
  }
  func.func @transform_18(%arg0: i32) -> (i32, i32, i32) {
    %c0_i32 = arith.constant 0 : i32
    %c0_i32_0 = arith.constant 0 : i32
    %c0_i32_1 = arith.constant 0 : i32
    return %arg0, %c0_i32, %c0_i32_0 : i32, i32, i32
  }
}

</mosaic_0001>

<llo_original>
// kernel: mha_moe_layer_forward.1
$region0: #{mha_moe_layer_forward.1}
  #allocation0 [shape = 'u32[]', space=smem, size = 0x4, offset = 0x4, fixed_abs, tag = 'smem constant byte address 0x4 - core index']
  #allocation1 [shape = 'u32[144,128]{1,0:T(1,128)}', space=vmem, size = 0x12000, scoped, tag = 'internal scratch']
  %s0 = inlined_call_operand.vmem [shape: f32[2,8,128], index: 0, kind: input, shape index: {}]
  %s1 = inlined_call_operand.vmem [shape: bf16[128,384], index: 1, kind: input, shape index: {}]
  %s2 = inlined_call_operand.vmem [shape: f32[1,384], index: 2, kind: input, shape index: {}]
  %s3 = inlined_call_operand.vmem [shape: bf16[128,128], index: 3, kind: input, shape index: {}]
  %s4 = inlined_call_operand.vmem [shape: f32[1,128], index: 4, kind: input, shape index: {}]
  %s5 = inlined_call_operand.vmem [shape: f32[1,128], index: 5, kind: input, shape index: {}]
  %s6 = inlined_call_operand.vmem [shape: f32[1,128], index: 6, kind: input, shape index: {}]
  %s7 = inlined_call_operand.vmem [shape: f32[128,128], index: 7, kind: input, shape index: {}, may-alias: {7,9}]
  %s8 = inlined_call_operand.vmem [shape: f32[16,128], index: 8, kind: input, shape index: {}]
  %s9 = inlined_call_operand.vmem [shape: f32[128,128], index: 9, kind: input, shape index: {}, may-alias: {7,9}]
  %s10 = inlined_call_operand.vmem [shape: f32[128,4], index: 10, kind: input, shape index: {}]
  %s11 = inlined_call_operand.hbm [shape: bf16[128,256], index: 11, kind: input, shape index: {}]
  %s12 = inlined_call_operand.vmem [shape: f32[1,256], index: 12, kind: input, shape index: {}]
  %s13 = inlined_call_operand.vmem [shape: f32[4,256], index: 13, kind: input, shape index: {}]
  %s14 = inlined_call_operand.hbm [shape: bf16[256,128], index: 14, kind: input, shape index: {}]
  %s15 = inlined_call_operand.vmem [shape: f32[4,128], index: 15, kind: input, shape index: {}]
  %s16 = inlined_call_operand.vmem [shape: f32[1,128], index: 16, kind: input, shape index: {}]
  %s17 = inlined_call_operand.vmem [shape: f32[1,128], index: 17, kind: input, shape index: {}]
  %s18 = inlined_call_operand.hbm [shape: f32[2,8,128], index: 18, kind: output, shape index: {}]
  %s19 = sld [smem:[#allocation0]]
  $region90: #{mha_moe_layer_forward.1} parent=0
    _
  %s21 = ssub.s32 1, %s19
  %s22 = scalar_select 0, %s21, %s19
  $region1: #{mha_moe_layer_forward.1} parent=0
    #allocation2 [shape = 'u8[65536]{0}', space=vmem, size = 0x10000, scoped, tag = 'input window, operand 11, single buffered']
    #allocation3 [shape = 's32[1]{0}', space=sflag, size = 0x4, scoped, tag = 'scoped memory for mha_moe_layer_forward.1']
    #allocation4 [shape = 's32[1]{0}', space=sflag, size = 0x4, scoped, tag = 'scoped memory for mha_moe_layer_forward.1']
    #allocation5 [shape = 'u8[65536]{0}', space=vmem, size = 0x10000, scoped, tag = 'input window, operand 14, single buffered']
    #allocation6 [shape = 's32[1]{0}', space=sflag, size = 0x4, scoped, tag = 'scoped memory for mha_moe_layer_forward.1']
    #allocation7 [shape = 'u8[8192]{0}', space=vmem, size = 0x2000, scoped, tag = 'output window, operand 0, single buffered']
    %23 = vsyncpa [#allocation3], 0
    %24 = vsyncpa [#allocation6], 0
    %25 = vsyncpa [#allocation4], 0
    // Predicated region
    $region2: #{mha_moe_layer_forward.1} parent=1 // pred_check
      _
    $region3: #{mha_moe_layer_forward.1} parent=1 // pred_check_branch
      %27 = sbr.rel (0) target = $region5
    $region4: #{mha_moe_layer_forward.1} parent=1 // pred_region
      _
    $region5: #{mha_moe_layer_forward.1} parent=1 // pred_fallthru
      _
    // Predicated region
    $region6: #{mha_moe_layer_forward.1} parent=1 // pred_check
      _
    $region7: #{mha_moe_layer_forward.1} parent=1 // pred_check_branch
      %29 = sbr.rel (0) target = $region9
    $region8: #{mha_moe_layer_forward.1} parent=1 // pred_region
      _
    $region9: #{mha_moe_layer_forward.1} parent=1 // pred_fallthru
      _
    // Predicated region
    $region10: #{mha_moe_layer_forward.1} parent=1 // pred_check
      _
    $region11: #{mha_moe_layer_forward.1} parent=1 // pred_check_branch
      %31 = sbr.rel (0) target = $region13
    $region12: #{mha_moe_layer_forward.1} parent=1 // pred_region
      _
    $region13: #{mha_moe_layer_forward.1} parent=1 // pred_fallthru
      _
    // Predicated region
    $region14: #{mha_moe_layer_forward.1} parent=1 // pred_check
      _
    $region15: #{mha_moe_layer_forward.1} parent=1 // pred_check_branch
      %33 = sbr.rel (0) target = $region17
    $region16: #{mha_moe_layer_forward.1} parent=1 // pred_region
      _
    $region17: #{mha_moe_layer_forward.1} parent=1 // pred_fallthru
      _
    // Predicated region
    $region18: #{mha_moe_layer_forward.1} parent=1 // pred_check
      _
    $region19: #{mha_moe_layer_forward.1} parent=1 // pred_check_branch
      %35 = sbr.rel (0) target = $region21
    $region20: #{mha_moe_layer_forward.1} parent=1 // pred_region
      _
    $region21: #{mha_moe_layer_forward.1} parent=1 // pred_fallthru
      _
    // Predicated region
    $region22: #{mha_moe_layer_forward.1} parent=1 // pred_check
      _
    $region23: #{mha_moe_layer_forward.1} parent=1 // pred_check_branch
      %37 = sbr.rel (0) target = $region25
    $region24: #{mha_moe_layer_forward.1} parent=1 // pred_region
      _
    $region25: #{mha_moe_layer_forward.1} parent=1 // pred_fallthru
      _
    // Predicated region
    $region26: #{mha_moe_layer_forward.1} parent=1 // pred_check
      _
    $region27: #{mha_moe_layer_forward.1} parent=1 // pred_check_branch
      %39 = sbr.rel (0) target = $region29
    $region28: #{mha_moe_layer_forward.1} parent=1 // pred_region
      _
    $region29: #{mha_moe_layer_forward.1} parent=1 // pred_fallthru
      _
    // Predicated region
    $region30: #{mha_moe_layer_forward.1} parent=1 // pred_check
      _
    $region31: #{mha_moe_layer_forward.1} parent=1 // pred_check_branch
      %41 = sbr.rel (0) target = $region33
    $region32: #{mha_moe_layer_forward.1} parent=1 // pred_region
      _
    $region33: #{mha_moe_layer_forward.1} parent=1 // pred_fallthru
      _
    // Predicated region
    $region34: #{mha_moe_layer_forward.1} parent=1 // pred_check
      _
    $region35: #{mha_moe_layer_forward.1} parent=1 // pred_check_branch
      %43 = sbr.rel (0) target = $region37
    $region36: #{mha_moe_layer_forward.1} parent=1 // pred_region
      _
    $region37: #{mha_moe_layer_forward.1} parent=1 // pred_fallthru
      _
    // Predicated region
    $region38: #{mha_moe_layer_forward.1} parent=1 // pred_check
      _
    $region39: #{mha_moe_layer_forward.1} parent=1 // pred_check_branch
      %45 = sbr.rel (0) target = $region41
    $region40: #{mha_moe_layer_forward.1} parent=1 // pred_region
      _
    $region41: #{mha_moe_layer_forward.1} parent=1 // pred_fallthru
      _
    // Predicated region
    $region42: #{mha_moe_layer_forward.1} parent=1 // pred_check
      _
    $region43: #{mha_moe_layer_forward.1} parent=1 // pred_check_branch
      %47 = sbr.rel (0) target = $region45
    $region44: #{mha_moe_layer_forward.1} parent=1 // pred_region
      _
    $region45: #{mha_moe_layer_forward.1} parent=1 // pred_fallthru
      _
    // Predicated region
    $region46: #{mha_moe_layer_forward.1} parent=1 // pred_check
      _
    $region47: #{mha_moe_layer_forward.1} parent=1 // pred_check_branch
      %49 = sbr.rel (0) target = $region49
    $region48: #{mha_moe_layer_forward.1} parent=1 // pred_region
      %s51 = ssub.s32 2048, 2048
      %52 = vsyncadd [#allocation3], %s51
      %s53 = sshll.u32 [#allocation2], 4
      %s54 = int_to_ptr.vmem [resolvable:$true] %s53
      %59 = dma.hbm_to_vmem [thread:$0]  %s11, 2048, %s54, [#allocation3], 128, 128, 8
    $region49: #{mha_moe_layer_forward.1} parent=1 // pred_fallthru
      _
    // Predicated region
    $region50: #{mha_moe_layer_forward.1} parent=1 // pred_check
      _
    $region51: #{mha_moe_layer_forward.1} parent=1 // pred_check_branch
      %61 = sbr.rel (0) target = $region53
    $region52: #{mha_moe_layer_forward.1} parent=1 // pred_region
      _
    $region53: #{mha_moe_layer_forward.1} parent=1 // pred_fallthru
      _
    // Predicated region
    $region54: #{mha_moe_layer_forward.1} parent=1 // pred_check
      _
    $region55: #{mha_moe_layer_forward.1} parent=1 // pred_check_branch
      %63 = sbr.rel (0) target = $region57
    $region56: #{mha_moe_layer_forward.1} parent=1 // pred_region
      _
    $region57: #{mha_moe_layer_forward.1} parent=1 // pred_fallthru
      _
    // Predicated region
    $region58: #{mha_moe_layer_forward.1} parent=1 // pred_check
      _
    $region59: #{mha_moe_layer_forward.1} parent=1 // pred_check_branch
      %65 = sbr.rel (0) target = $region61
    $region60: #{mha_moe_layer_forward.1} parent=1 // pred_region
      %s67 = ssub.s32 2048, 2048
      %68 = vsyncadd [#allocation6], %s67
      %s69 = sshll.u32 [#allocation5], 4
      %s70 = int_to_ptr.vmem [resolvable:$true] %s69
      %75 = dma.hbm_to_vmem [thread:$0]  %s14, 2048, %s70, [#allocation6], 64, 64, 4
    $region61: #{mha_moe_layer_forward.1} parent=1 // pred_fallthru
      _
    // Predicated region
    $region62: #{mha_moe_layer_forward.1} parent=1 // pred_check
      _
    $region63: #{mha_moe_layer_forward.1} parent=1 // pred_check_branch
      %77 = sbr.rel (0) target = $region65
    $region64: #{mha_moe_layer_forward.1} parent=1 // pred_region
      _
    $region65: #{mha_moe_layer_forward.1} parent=1 // pred_fallthru
      _
    // Predicated region
    $region66: #{mha_moe_layer_forward.1} parent=1 // pred_check
      _
    $region67: #{mha_moe_layer_forward.1} parent=1 // pred_check_branch
      %79 = sbr.rel (0) target = $region69
    $region68: #{mha_moe_layer_forward.1} parent=1 // pred_region
      _
    $region69: #{mha_moe_layer_forward.1} parent=1 // pred_fallthru
      _
    // Predicated region
    $region70: #{mha_moe_layer_forward.1} parent=1 // pred_check
      _
    $region71: #{mha_moe_layer_forward.1} parent=1 // pred_check_branch
      %81 = sbr.rel (0) target = $region73
    $region72: #{mha_moe_layer_forward.1} parent=1 // pred_region
      _
    $region73: #{mha_moe_layer_forward.1} parent=1 // pred_fallthru
      _
    // Predicated region
    $region74: #{mha_moe_layer_forward.1} parent=1 // pred_check
      _
    $region75: #{mha_moe_layer_forward.1} parent=1 // pred_check_branch
      %83 = sbr.rel (0) target = $region77
    $region76: #{mha_moe_layer_forward.1} parent=1 // pred_region
      %84 = dma.done [#allocation3], 2048
    $region77: #{mha_moe_layer_forward.1} parent=1 // pred_fallthru
      _
    // Predicated region
    $region78: #{mha_moe_layer_forward.1} parent=1 // pred_check
      _
    $region79: #{mha_moe_layer_forward.1} parent=1 // pred_check_branch
      %86 = sbr.rel (0) target = $region81
    $region80: #{mha_moe_layer_forward.1} parent=1 // pred_region
      %87 = dma.done [#allocation6], 2048
    $region81: #{mha_moe_layer_forward.1} parent=1 // pred_fallthru
      _
    %v89 = vld [vmem:[%s0] sm:$0xff]
    %v90 = vld [vmem:[%s0 + $0x8] sm:$0xff]
    %v91 = vpack.c.bf16 %v90, %v89
    %v92 = vld [vmem:[%s1] sm:$0xff]
    %v93 = vld [vmem:[%s1 + $0x8] sm:$0xf]
    %v94 = vld [vmem:[%s1 + $0xc] sm:$0xff]
    %v95 = vld [vmem:[%s1 + $0x14] sm:$0xf]
    %v96 = vld [vmem:[%s1 + $0x18] sm:$0xff]
    %v97 = vld [vmem:[%s1 + $0x20] sm:$0xf]
    %v98 = vld [vmem:[%s1 + $0x24] sm:$0xff]
    %v99 = vld [vmem:[%s1 + $0x2c] sm:$0xf]
    %v100 = vld [vmem:[%s1 + $0x30] sm:$0xff]
    %v101 = vld [vmem:[%s1 + $0x38] sm:$0xf]
    %v102 = vld [vmem:[%s1 + $0x3c] sm:$0xff]
    %v103 = vld [vmem:[%s1 + $0x44] sm:$0xf]
    %v104 = vld [vmem:[%s1 + $0x48] sm:$0xff]
    %v105 = vld [vmem:[%s1 + $0x50] sm:$0xf]
    %v106 = vld [vmem:[%s1 + $0x54] sm:$0xff]
    %v107 = vld [vmem:[%s1 + $0x5c] sm:$0xf]
    %v108 = vld [vmem:[%s1 + $0x60] sm:$0xff]
    %v109 = vld [vmem:[%s1 + $0x68] sm:$0xf]
    %v110 = vld [vmem:[%s1 + $0x6c] sm:$0xff]
    %v111 = vld [vmem:[%s1 + $0x74] sm:$0xf]
    %v112 = vld [vmem:[%s1 + $0x78] sm:$0xff]
    %v113 = vld [vmem:[%s1 + $0x80] sm:$0xf]
    %v114 = vld [vmem:[%s1 + $0x84] sm:$0xff]
    %v115 = vld [vmem:[%s1 + $0x8c] sm:$0xf]
    %v116 = vld [vmem:[%s1 + $0x90] sm:$0xff]
    %v117 = vld [vmem:[%s1 + $0x98] sm:$0xf]
    %v118 = vld [vmem:[%s1 + $0x9c] sm:$0xff]
    %v119 = vld [vmem:[%s1 + $0xa4] sm:$0xf]
    %v120 = vld [vmem:[%s1 + $0xa8] sm:$0xff]
    %v121 = vld [vmem:[%s1 + $0xb0] sm:$0xf]
    %v122 = vld [vmem:[%s1 + $0xb4] sm:$0xff]
    %v123 = vld [vmem:[%s1 + $0xbc] sm:$0xf]
    %v124 = vld [vmem:[%s2] sm:$0x7]
    %v126 = vlaneseq
    %v127 = vshrl.u32 %v126, 7
    %v128 = vsub.s32 0, %v127
    %v129 = vrot.slane %v124, %v128
    %v130 = vlaneseq
    %v131 = vshrl.u32 %v130, 7
    %v132 = vsub.s32 1, %v131
    %v133 = vrot.slane %v124, %v132
    %v134 = vlaneseq
    %v135 = vshrl.u32 %v134, 7
    %v136 = vsub.s32 2, %v135
    %v137 = vrot.slane %v124, %v136
    %v173 = vunpack.c.l.b16 %v92
    %v174 = vunpack.c.h.b16 %v92
    %v175 = vunpack.c.l.b16 %v93
    %v176 = vunpack.c.l.b16 %v94
    %v177 = vunpack.c.h.b16 %v94
    %v178 = vunpack.c.l.b16 %v95
    %v179 = vunpack.c.l.b16 %v96
    %v180 = vunpack.c.h.b16 %v96
    %v181 = vunpack.c.l.b16 %v97
    %v182 = vunpack.c.l.b16 %v98
    %v183 = vunpack.c.h.b16 %v98
    %v184 = vunpack.c.l.b16 %v99
    %v185 = vunpack.c.l.b16 %v100
    %v186 = vunpack.c.h.b16 %v100
    %v187 = vunpack.c.l.b16 %v101
    %v188 = vunpack.c.l.b16 %v102
    %v189 = vunpack.c.h.b16 %v102
    %v190 = vunpack.c.l.b16 %v103
    %v191 = vunpack.c.l.b16 %v104
    %v192 = vunpack.c.h.b16 %v104
    %v193 = vunpack.c.l.b16 %v105
    %v194 = vunpack.c.l.b16 %v106
    %v195 = vunpack.c.h.b16 %v106
    %v196 = vunpack.c.l.b16 %v107
    %v197 = vunpack.c.l.b16 %v108
    %v198 = vunpack.c.h.b16 %v108
    %v199 = vunpack.c.l.b16 %v109
    %v200 = vunpack.c.l.b16 %v110
    %v201 = vunpack.c.h.b16 %v110
    %v202 = vunpack.c.l.b16 %v111
    %v203 = vunpack.c.l.b16 %v112
    %v204 = vunpack.c.h.b16 %v112
    %v205 = vunpack.c.l.b16 %v113
    %v206 = vunpack.c.l.b16 %v114
    %v207 = vunpack.c.h.b16 %v114
    %v208 = vunpack.c.l.b16 %v115
    %v209 = vunpack.c.l.b16 %v116
    %v210 = vunpack.c.h.b16 %v116
    %v211 = vunpack.c.l.b16 %v117
    %v212 = vunpack.c.l.b16 %v118
    %v213 = vunpack.c.h.b16 %v118
    %v214 = vunpack.c.l.b16 %v119
    %v215 = vunpack.c.l.b16 %v120
    %v216 = vunpack.c.h.b16 %v120
    %v217 = vunpack.c.l.b16 %v121
    %v218 = vunpack.c.l.b16 %v122
    %v219 = vunpack.c.h.b16 %v122
    %v220 = vunpack.c.l.b16 %v123
    %v221 = vpack.c.b16 %v176, %v173
    %v222 = vpack.c.b16 %v177, %v174
    %v223 = vpack.c.b16 %v178, %v175
    %v224 = vpack.c.b16 %v182, %v179
    %v225 = vpack.c.b16 %v183, %v180
    %v226 = vpack.c.b16 %v184, %v181
    %v227 = vpack.c.b16 %v188, %v185
    %v228 = vpack.c.b16 %v189, %v186
    %v229 = vpack.c.b16 %v190, %v187
    %v230 = vpack.c.b16 %v194, %v191
    %v231 = vpack.c.b16 %v195, %v192
    %v232 = vpack.c.b16 %v196, %v193
    %v233 = vpack.c.b16 %v200, %v197
    %v234 = vpack.c.b16 %v201, %v198
    %v235 = vpack.c.b16 %v202, %v199
    %v236 = vpack.c.b16 %v206, %v203
    %v237 = vpack.c.b16 %v207, %v204
    %v238 = vpack.c.b16 %v208, %v205
    %v239 = vpack.c.b16 %v212, %v209
    %v240 = vpack.c.b16 %v213, %v210
    %v241 = vpack.c.b16 %v214, %v211
    %v242 = vpack.c.b16 %v218, %v215
    %v243 = vpack.c.b16 %v219, %v216
    %v244 = vpack.c.b16 %v220, %v217
    %269 = vmatprep.subr.bf16.mxu0 %v222
    %270 = vmatpush1.bf16.msra.mxu0 %v221
    %271 = vmatprep.subr.bf16.mxu0 %v225
    %272 = vmatpush1.bf16.msra.mxu0 %v224
    %273 = vmatprep.subr.bf16.mxu0 %v228
    %274 = vmatpush1.bf16.msra.mxu0 %v227
    %275 = vmatprep.subr.bf16.mxu0 %v231
    %276 = vmatpush1.bf16.msra.mxu0 %v230
    %277 = vmatprep.subr.bf16.mxu0 %v234
    %278 = vmatpush1.bf16.msra.mxu0 %v233
    %279 = vmatprep.subr.bf16.mxu0 %v237
    %280 = vmatpush1.bf16.msra.mxu0 %v236
    %281 = vmatprep.subr.bf16.mxu0 %v240
    %282 = vmatpush1.bf16.msra.mxu0 %v239
    %283 = vmatprep.subr.bf16.mxu0 %v243
    %284 = vmatpush1.bf16.msra.mxu0 %v242
    %285 = vmatprep.subr.bf16.mxu0 0
    %286 = vmatpush1.bf16.msra.mxu0 0
    %287 = vmatprep.subr.bf16.mxu0 0
    %288 = vmatpush1.bf16.msra.mxu0 0
    %289 = vmatprep.subr.bf16.mxu0 0
    %290 = vmatpush1.bf16.msra.mxu0 0
    %291 = vmatprep.subr.bf16.mxu0 0
    %292 = vmatpush1.bf16.msra.mxu0 0
    %293 = vmatprep.subr.bf16.mxu0 0
    %294 = vmatpush1.bf16.msra.mxu0 0
    %295 = vmatprep.subr.bf16.mxu0 0
    %296 = vmatpush1.bf16.msra.mxu0 0
    %297 = vmatprep.subr.bf16.mxu0 0
    %298 = vmatpush1.bf16.msra.mxu0 0
    %299 = vmatprep.subr.bf16.mxu0 0
    %300 = vmatpush1.bf16.msra.mxu0 0
    %301 = vmatprep.mubr.bf16.mxu0 0
    %302 = vmatmul.mubr.bf16.gmra.mrb[0].mxu0 %v91
    %v303 = vpop.f32.mrb[0].mxu0
    %v304 = vadd.f32 %v129, %v303
    %v305 = vpop.f32.mrb[0].mxu0
    %v306 = vadd.f32 %v133, %v305
    %v307 = vpop.f32.mrb[0].mxu0
    %v308 = vadd.f32 %v129, %v307
    %v309 = vpop.f32.mrb[0].mxu0
    %v310 = vadd.f32 %v133, %v309
    %311 = vdwg.mxu0
    %312 = vmatprep.subr.bf16.mxu0 0
    %313 = vmatpush1.bf16.msra.mxu0 %v223
    %314 = vmatprep.subr.bf16.mxu0 0
    %315 = vmatpush1.bf16.msra.mxu0 %v226
    %316 = vmatprep.subr.bf16.mxu0 0
    %317 = vmatpush1.bf16.msra.mxu0 %v229
    %318 = vmatprep.subr.bf16.mxu0 0
    %319 = vmatpush1.bf16.msra.mxu0 %v232
    %320 = vmatprep.subr.bf16.mxu0 0
    %321 = vmatpush1.bf16.msra.mxu0 %v235
    %322 = vmatprep.subr.bf16.mxu0 0
    %323 = vmatpush1.bf16.msra.mxu0 %v238
    %324 = vmatprep.subr.bf16.mxu0 0
    %325 = vmatpush1.bf16.msra.mxu0 %v241
    %326 = vmatprep.subr.bf16.mxu0 0
    %327 = vmatpush1.bf16.msra.mxu0 %v244
    %328 = vmatprep.subr.bf16.mxu0 0
    %329 = vmatpush1.bf16.msra.mxu0 0
    %330 = vmatprep.subr.bf16.mxu0 0
    %331 = vmatpush1.bf16.msra.mxu0 0
    %332 = vmatprep.subr.bf16.mxu0 0
    %333 = vmatpush1.bf16.msra.mxu0 0
    %334 = vmatprep.subr.bf16.mxu0 0
    %335 = vmatpush1.bf16.msra.mxu0 0
    %336 = vmatprep.subr.bf16.mxu0 0
    %337 = vmatpush1.bf16.msra.mxu0 0
    %338 = vmatprep.subr.bf16.mxu0 0
    %339 = vmatpush1.bf16.msra.mxu0 0
    %340 = vmatprep.subr.bf16.mxu0 0
    %341 = vmatpush1.bf16.msra.mxu0 0
    %342 = vmatprep.subr.bf16.mxu0 0
    %343 = vmatpush1.bf16.msra.mxu0 0
    %344 = vmatprep.mubr.bf16.mxu0 0
    %345 = vmatmul.mubr.bf16.gmra.mrb[0].mxu0 %v91
    %v346 = vpop.f32.mrb[0].mxu0
    %v347 = vadd.f32 %v137, %v346
    %v348 = vpop.f32.mrb[0].mxu0
    %v349 = vpop.f32.mrb[0].mxu0
    %v350 = vadd.f32 %v137, %v349
    %v351 = vpop.f32.mrb[0].mxu0
    %352 = vdwg.mxu0
    %v353 = vld [vmem:[%s7] sm:$0xff]
    %v354 = vld [vmem:[%s7 + $0x8] sm:$0xff]
    %v355 = vld [vmem:[%s7 + $0x10] sm:$0xff]
    %v356 = vld [vmem:[%s7 + $0x18] sm:$0xff]
    %v357 = vld [vmem:[%s7 + $0x20] sm:$0xff]
    %v358 = vld [vmem:[%s7 + $0x28] sm:$0xff]
    %v359 = vld [vmem:[%s7 + $0x30] sm:$0xff]
    %v360 = vld [vmem:[%s7 + $0x38] sm:$0xff]
    %v361 = vld [vmem:[%s7 + $0x40] sm:$0xff]
    %v362 = vld [vmem:[%s7 + $0x48] sm:$0xff]
    %v363 = vld [vmem:[%s7 + $0x50] sm:$0xff]
    %v364 = vld [vmem:[%s7 + $0x58] sm:$0xff]
    %v365 = vld [vmem:[%s7 + $0x60] sm:$0xff]
    %v366 = vld [vmem:[%s7 + $0x68] sm:$0xff]
    %v367 = vld [vmem:[%s7 + $0x70] sm:$0xff]
    %v368 = vld [vmem:[%s7 + $0x78] sm:$0xff]
    %v369 = vmul.f32 %v306, %v353
    %v370 = vmul.f32 %v310, %v354
    %v371 = vmul.f32 %v306, %v355
    %v372 = vmul.f32 %v310, %v356
    %v373 = vmul.f32 %v306, %v357
    %v374 = vmul.f32 %v310, %v358
    %v375 = vmul.f32 %v306, %v359
    %v376 = vmul.f32 %v310, %v360
    %v377 = vmul.f32 %v306, %v361
    %v378 = vmul.f32 %v310, %v362
    %v379 = vmul.f32 %v306, %v363
    %v380 = vmul.f32 %v310, %v364
    %v381 = vmul.f32 %v306, %v365
    %v382 = vmul.f32 %v310, %v366
    %v383 = vmul.f32 %v306, %v367
    %v384 = vmul.f32 %v310, %v368
    %v385 = vmul.f32 %v347, %v353
    %v386 = vmul.f32 %v350, %v354
    %v387 = vmul.f32 %v347, %v355
    %v388 = vmul.f32 %v350, %v356
    %v389 = vmul.f32 %v347, %v357
    %v390 = vmul.f32 %v350, %v358
    %v391 = vmul.f32 %v347, %v359
    %v392 = vmul.f32 %v350, %v360
    %v393 = vmul.f32 %v347, %v361
    %v394 = vmul.f32 %v350, %v362
    %v395 = vmul.f32 %v347, %v363
    %v396 = vmul.f32 %v350, %v364
    %v397 = vmul.f32 %v347, %v365
    %v398 = vmul.f32 %v350, %v366
    %v399 = vmul.f32 %v347, %v367
    %v400 = vmul.f32 %v350, %v368
    %v401 = vpack.c.bf16 %v308, %v304
    %v402 = vpack.c.bf16 %v370, %v369
    %v403 = vpack.c.bf16 %v372, %v371
    %v404 = vpack.c.bf16 %v374, %v373
    %v405 = vpack.c.bf16 %v376, %v375
    %v406 = vpack.c.bf16 %v378, %v377
    %v407 = vpack.c.bf16 %v380, %v379
    %v408 = vpack.c.bf16 %v382, %v381
    %v409 = vpack.c.bf16 %v384, %v383
    %v410 = vld [vmem:[%s8] sm:$0xff]
    %v411 = vld [vmem:[%s8 + $0x8] sm:$0xff]
    %412 = vmatprep.subr.bf16.mxu0 0
    %413 = vmatpush1.bf16.xpose.msra.mxu0 %v402
    %414 = vmatprep.subr.bf16.mxu0 0
    %415 = vmatpush1.bf16.xpose.msra.mxu0 %v403
    %416 = vmatprep.subr.bf16.mxu0 0
    %417 = vmatpush1.bf16.xpose.msra.mxu0 %v404
    %418 = vmatprep.subr.bf16.mxu0 0
    %419 = vmatpush1.bf16.xpose.msra.mxu0 %v405
    %420 = vmatprep.subr.bf16.mxu0 0
    %421 = vmatpush1.bf16.xpose.msra.mxu0 %v406
    %422 = vmatprep.subr.bf16.mxu0 0
    %423 = vmatpush1.bf16.xpose.msra.mxu0 %v407
    %424 = vmatprep.subr.bf16.mxu0 0
    %425 = vmatpush1.bf16.xpose.msra.mxu0 %v408
    %426 = vmatprep.subr.bf16.mxu0 0
    %427 = vmatpush1.bf16.xpose.msra.mxu0 %v409
    %428 = vmatprep.subr.bf16.mxu0 0
    %429 = vmatpush1.bf16.xpose.msra.mxu0 0
    %430 = vmatprep.subr.bf16.mxu0 0
    %431 = vmatpush1.bf16.xpose.msra.mxu0 0
    %432 = vmatprep.subr.bf16.mxu0 0
    %433 = vmatpush1.bf16.xpose.msra.mxu0 0
    %434 = vmatprep.subr.bf16.mxu0 0
    %435 = vmatpush1.bf16.xpose.msra.mxu0 0
    %436 = vmatprep.subr.bf16.mxu0 0
    %437 = vmatpush1.bf16.xpose.msra.mxu0 0
    %438 = vmatprep.subr.bf16.mxu0 0
    %439 = vmatpush1.bf16.xpose.msra.mxu0 0
    %440 = vmatprep.subr.bf16.mxu0 0
    %441 = vmatpush1.bf16.xpose.msra.mxu0 0
    %442 = vmatprep.subr.bf16.mxu0 0
    %443 = vmatpush1.bf16.xpose.msra.mxu0 0
    %444 = vmatprep.mubr.bf16.mxu0 0
    %445 = vmatmul.mubr.bf16.gmra.mrb[0].mxu0 %v401
    %v446 = vpop.f32.mrb[0].mxu0
    %v447 = vadd.f32 %v410, %v446
    %v448 = vpop.f32.mrb[0].mxu0
    %v449 = vpop.f32.mrb[0].mxu0
    %v450 = vadd.f32 %v411, %v449
    %v451 = vpop.f32.mrb[0].mxu0
    %452 = vdwg.mxu0
    %453 = vmax.xlane.f32.xlu0 %v447
    %v454 = vpop.xlane.xlu0 %453
    %455 = vmax.xlane.f32.xlu0 %v450
    %v456 = vpop.xlane.xlu0 %455
    %v457 = vsub.f32 %v447, %v454
    %v458 = vsub.f32 %v450, %v456
    %v459 = vmul.f32 %v457, 1.442695
    %v460 = vpow.pop %v459
    %v461 = vmul.f32 %v458, 1.442695
    %v462 = vpow.pop %v461
    %v463 = vld [vmem:[%s9] sm:$0xff]
    %v464 = vld [vmem:[%s9 + $0x8] sm:$0xff]
    %v465 = vld [vmem:[%s9 + $0x10] sm:$0xff]
    %v466 = vld [vmem:[%s9 + $0x18] sm:$0xff]
    %v467 = vld [vmem:[%s9 + $0x20] sm:$0xff]
    %v468 = vld [vmem:[%s9 + $0x28] sm:$0xff]
    %v469 = vld [vmem:[%s9 + $0x30] sm:$0xff]
    %v470 = vld [vmem:[%s9 + $0x38] sm:$0xff]
    %v471 = vld [vmem:[%s9 + $0x40] sm:$0xff]
    %v472 = vld [vmem:[%s9 + $0x48] sm:$0xff]
    %v473 = vld [vmem:[%s9 + $0x50] sm:$0xff]
    %v474 = vld [vmem:[%s9 + $0x58] sm:$0xff]
    %v475 = vld [vmem:[%s9 + $0x60] sm:$0xff]
    %v476 = vld [vmem:[%s9 + $0x68] sm:$0xff]
    %v477 = vld [vmem:[%s9 + $0x70] sm:$0xff]
    %v478 = vld [vmem:[%s9 + $0x78] sm:$0xff]
    %479 = vmatprep.subr.mxu0 0.0
    %480 = vmatpush1.msra.mxu0 %v463
    %481 = vmatprep.subr.mxu0 0.0
    %482 = vmatpush1.msra.mxu0 %v464
    %483 = vmatprep.subr.mxu0 0.0
    %484 = vmatpush1.msra.mxu0 %v465
    %485 = vmatprep.subr.mxu0 0.0
    %486 = vmatpush1.msra.mxu0 %v466
    %487 = vmatprep.subr.mxu0 0.0
    %488 = vmatpush1.msra.mxu0 %v467
    %489 = vmatprep.subr.mxu0 0.0
    %490 = vmatpush1.msra.mxu0 %v468
    %491 = vmatprep.subr.mxu0 0.0
    %492 = vmatpush1.msra.mxu0 %v469
    %493 = vmatprep.subr.mxu0 0.0
    %494 = vmatpush1.msra.mxu0 %v470
    %495 = vmatprep.subr.mxu0 0.0
    %496 = vmatpush1.msra.mxu0 %v471
    %497 = vmatprep.subr.mxu0 0.0
    %498 = vmatpush1.msra.mxu0 %v472
    %499 = vmatprep.subr.mxu0 0.0
    %500 = vmatpush1.msra.mxu0 %v473
    %501 = vmatprep.subr.mxu0 0.0
    %502 = vmatpush1.msra.mxu0 %v474
    %503 = vmatprep.subr.mxu0 0.0
    %504 = vmatpush1.msra.mxu0 %v475
    %505 = vmatprep.subr.mxu0 0.0
    %506 = vmatpush1.msra.mxu0 %v476
    %507 = vmatprep.subr.mxu0 0.0
    %508 = vmatpush1.msra.mxu0 %v477
    %509 = vmatprep.subr.mxu0 0.0
    %510 = vmatpush1.msra.mxu0 %v478
    %511 = vmatprep.subr.mxu0 0.0
    %512 = vmatpush1.msra.mxu0 0.0
    %513 = vmatprep.subr.mxu0 0.0
    %514 = vmatpush1.msra.mxu0 0.0
    %515 = vmatprep.subr.mxu0 0.0
    %516 = vmatpush1.msra.mxu0 0.0
    %517 = vmatprep.subr.mxu0 0.0
    %518 = vmatpush1.msra.mxu0 0.0
    %519 = vmatprep.subr.mxu0 0.0
    %520 = vmatpush1.msra.mxu0 0.0
    %521 = vmatprep.subr.mxu0 0.0
    %522 = vmatpush1.msra.mxu0 0.0
    %523 = vmatprep.subr.mxu0 0.0
    %524 = vmatpush1.msra.mxu0 0.0
    %525 = vmatprep.subr.mxu0 0.0
    %526 = vmatpush1.msra.mxu0 0.0
    %527 = vmatprep.subr.mxu0 0.0
    %528 = vmatpush1.msra.mxu0 0.0
    %529 = vmatprep.subr.mxu0 0.0
    %530 = vmatpush1.msra.mxu0 0.0
    %531 = vmatprep.subr.mxu0 0.0
    %532 = vmatpush1.msra.mxu0 0.0
    %533 = vmatprep.subr.mxu0 0.0
    %534 = vmatpush1.msra.mxu0 0.0
    %535 = vmatprep.subr.mxu0 0.0
    %536 = vmatpush1.msra.mxu0 0.0
    %537 = vmatprep.subr.mxu0 0.0
    %538 = vmatpush1.msra.mxu0 0.0
    %539 = vmatprep.subr.mxu0 0.0
    %540 = vmatpush1.msra.mxu0 0.0
    %541 = vmatprep.subr.mxu0 0.0
    %542 = vmatpush1.msra.mxu0 0.0
    %543 = vmatprep.mubr.f32.mxu0 0.0
    %544 = vmatmul.mubr.f32.gmra.mrb[0].mxu0 %v460
    %v545 = vpop.f32.mrb[0].mxu0
    %v546 = vadd.f32 1e-30, %v545
    %v547 = vpop.f32.mrb[0].mxu0
    %548 = vmatprep.mubr.f32.mxu0 0.0
    %549 = vmatmul.mubr.f32.gmra.mrb[0].mxu0 %v462
    %v550 = vpop.f32.mrb[0].mxu0
    %v551 = vadd.f32 1e-30, %v550
    %v552 = vpop.f32.mrb[0].mxu0
    %553 = vdwg.mxu0
    %v554 = vrcp.pop %v546
    %v555 = vrcp.pop %v551
    %v556 = vmul.f32 %v460, %v554
    %v557 = vmul.f32 %v462, %v555
    %v558 = vpack.c.bf16 %v557, %v556
    %v559 = vpack.c.bf16 %v386, %v385
    %v560 = vpack.c.bf16 %v388, %v387
    %v561 = vpack.c.bf16 %v390, %v389
    %v562 = vpack.c.bf16 %v392, %v391
    %v563 = vpack.c.bf16 %v394, %v393
    %v564 = vpack.c.bf16 %v396, %v395
    %v565 = vpack.c.bf16 %v398, %v397
    %v566 = vpack.c.bf16 %v400, %v399
    %567 = vmatprep.subr.bf16.mxu0 0
    %568 = vmatpush1.bf16.msra.mxu0 %v559
    %569 = vmatprep.subr.bf16.mxu0 0
    %570 = vmatpush1.bf16.msra.mxu0 %v560
    %571 = vmatprep.subr.bf16.mxu0 0
    %572 = vmatpush1.bf16.msra.mxu0 %v561
    %573 = vmatprep.subr.bf16.mxu0 0
    %574 = vmatpush1.bf16.msra.mxu0 %v562
    %575 = vmatprep.subr.bf16.mxu0 0
    %576 = vmatpush1.bf16.msra.mxu0 %v563
    %577 = vmatprep.subr.bf16.mxu0 0
    %578 = vmatpush1.bf16.msra.mxu0 %v564
    %579 = vmatprep.subr.bf16.mxu0 0
    %580 = vmatpush1.bf16.msra.mxu0 %v565
    %581 = vmatprep.subr.bf16.mxu0 0
    %582 = vmatpush1.bf16.msra.mxu0 %v566
    %583 = vmatprep.subr.bf16.mxu0 0
    %584 = vmatpush1.bf16.msra.mxu0 0
    %585 = vmatprep.subr.bf16.mxu0 0
    %586 = vmatpush1.bf16.msra.mxu0 0
    %587 = vmatprep.subr.bf16.mxu0 0
    %588 = vmatpush1.bf16.msra.mxu0 0
    %589 = vmatprep.subr.bf16.mxu0 0
    %590 = vmatpush1.bf16.msra.mxu0 0
    %591 = vmatprep.subr.bf16.mxu0 0
    %592 = vmatpush1.bf16.msra.mxu0 0
    %593 = vmatprep.subr.bf16.mxu0 0
    %594 = vmatpush1.bf16.msra.mxu0 0
    %595 = vmatprep.subr.bf16.mxu0 0
    %596 = vmatpush1.bf16.msra.mxu0 0
    %597 = vmatprep.subr.bf16.mxu0 0
    %598 = vmatpush1.bf16.msra.mxu0 0
    %599 = vmatprep.mubr.bf16.mxu0 0
    %600 = vmatmul.mubr.bf16.gmra.mrb[0].mxu0 %v558
    %v601 = vpop.f32.mrb[0].mxu0
    %v602 = vadd.f32 0.0, %v601
    %v603 = vpop.f32.mrb[0].mxu0
    %v604 = vpop.f32.mrb[0].mxu0
    %v605 = vadd.f32 0.0, %v604
    %v606 = vpop.f32.mrb[0].mxu0
    %607 = vdwg.mxu0
    %v608 = vpack.c.bf16 %v605, %v602
    %v609 = vld [vmem:[%s3] sm:$0xf]
    %v610 = vld [vmem:[%s3 + $0x4] sm:$0xf]
    %v611 = vld [vmem:[%s3 + $0x8] sm:$0xf]
    %v612 = vld [vmem:[%s3 + $0xc] sm:$0xf]
    %v613 = vld [vmem:[%s3 + $0x10] sm:$0xf]
    %v614 = vld [vmem:[%s3 + $0x14] sm:$0xf]
    %v615 = vld [vmem:[%s3 + $0x18] sm:$0xf]
    %v616 = vld [vmem:[%s3 + $0x1c] sm:$0xf]
    %v617 = vld [vmem:[%s3 + $0x20] sm:$0xf]
    %v618 = vld [vmem:[%s3 + $0x24] sm:$0xf]
    %v619 = vld [vmem:[%s3 + $0x28] sm:$0xf]
    %v620 = vld [vmem:[%s3 + $0x2c] sm:$0xf]
    %v621 = vld [vmem:[%s3 + $0x30] sm:$0xf]
    %v622 = vld [vmem:[%s3 + $0x34] sm:$0xf]
    %v623 = vld [vmem:[%s3 + $0x38] sm:$0xf]
    %v624 = vld [vmem:[%s3 + $0x3c] sm:$0xf]
    %v625 = vld [vmem:[%s4] sm:$0x1]
    %v627 = vlaneseq
    %v628 = vshrl.u32 %v627, 7
    %v629 = vsub.s32 0, %v628
    %v630 = vrot.slane %v625, %v629
    %v648 = vunpack.c.l.b16 %v609
    %v649 = vunpack.c.l.b16 %v610
    %v650 = vunpack.c.l.b16 %v611
    %v651 = vunpack.c.l.b16 %v612
    %v652 = vunpack.c.l.b16 %v613
    %v653 = vunpack.c.l.b16 %v614
    %v654 = vunpack.c.l.b16 %v615
    %v655 = vunpack.c.l.b16 %v616
    %v656 = vunpack.c.l.b16 %v617
    %v657 = vunpack.c.l.b16 %v618
    %v658 = vunpack.c.l.b16 %v619
    %v659 = vunpack.c.l.b16 %v620
    %v660 = vunpack.c.l.b16 %v621
    %v661 = vunpack.c.l.b16 %v622
    %v662 = vunpack.c.l.b16 %v623
    %v663 = vunpack.c.l.b16 %v624
    %v664 = vpack.c.b16 %v649, %v648
    %v665 = vpack.c.b16 %v651, %v650
    %v666 = vpack.c.b16 %v653, %v652
    %v667 = vpack.c.b16 %v655, %v654
    %v668 = vpack.c.b16 %v657, %v656
    %v669 = vpack.c.b16 %v659, %v658
    %v670 = vpack.c.b16 %v661, %v660
    %v671 = vpack.c.b16 %v663, %v662
    %680 = vmatprep.subr.bf16.mxu0 0
    %681 = vmatpush1.bf16.msra.mxu0 %v664
    %682 = vmatprep.subr.bf16.mxu0 0
    %683 = vmatpush1.bf16.msra.mxu0 %v665
    %684 = vmatprep.subr.bf16.mxu0 0
    %685 = vmatpush1.bf16.msra.mxu0 %v666
    %686 = vmatprep.subr.bf16.mxu0 0
    %687 = vmatpush1.bf16.msra.mxu0 %v667
    %688 = vmatprep.subr.bf16.mxu0 0
    %689 = vmatpush1.bf16.msra.mxu0 %v668
    %690 = vmatprep.subr.bf16.mxu0 0
    %691 = vmatpush1.bf16.msra.mxu0 %v669
    %692 = vmatprep.subr.bf16.mxu0 0
    %693 = vmatpush1.bf16.msra.mxu0 %v670
    %694 = vmatprep.subr.bf16.mxu0 0
    %695 = vmatpush1.bf16.msra.mxu0 %v671
    %696 = vmatprep.subr.bf16.mxu0 0
    %697 = vmatpush1.bf16.msra.mxu0 0
    %698 = vmatprep.subr.bf16.mxu0 0
    %699 = vmatpush1.bf16.msra.mxu0 0
    %700 = vmatprep.subr.bf16.mxu0 0
    %701 = vmatpush1.bf16.msra.mxu0 0
    %702 = vmatprep.subr.bf16.mxu0 0
    %703 = vmatpush1.bf16.msra.mxu0 0
    %704 = vmatprep.subr.bf16.mxu0 0
    %705 = vmatpush1.bf16.msra.mxu0 0
    %706 = vmatprep.subr.bf16.mxu0 0
    %707 = vmatpush1.bf16.msra.mxu0 0
    %708 = vmatprep.subr.bf16.mxu0 0
    %709 = vmatpush1.bf16.msra.mxu0 0
    %710 = vmatprep.subr.bf16.mxu0 0
    %711 = vmatpush1.bf16.msra.mxu0 0
    %712 = vmatprep.mubr.bf16.mxu0 0
    %713 = vmatmul.mubr.bf16.gmra.mrb[0].mxu0 %v608
    %v714 = vpop.f32.mrb[0].mxu0
    %v715 = vadd.f32 %v630, %v714
    %v716 = vpop.f32.mrb[0].mxu0
    %v717 = vpop.f32.mrb[0].mxu0
    %v718 = vadd.f32 %v630, %v717
    %v719 = vpop.f32.mrb[0].mxu0
    %720 = vdwg.mxu0
    %v721 = vadd.f32 %v715, %v89
    %v722 = vadd.f32 %v718, %v90
    %v723 = vrot.slane %v721, 4
    %v724 = vadd.f32 %v721, %v723
    %v725 = vrot.slane %v724, 2
    %v726 = vadd.f32 %v724, %v725
    %v727 = vrot.slane %v726, 1
    %v728 = vadd.f32 %v726, %v727
    %v729 = vrot.slane %v722, 4
    %v730 = vadd.f32 %v722, %v729
    %v731 = vrot.slane %v730, 2
    %v732 = vadd.f32 %v730, %v731
    %v733 = vrot.slane %v732, 1
    %v734 = vadd.f32 %v732, %v733
    %v735 = vrcp.pop 8.0
    %v736 = vmul.f32 %v728, %v735
    %v737 = vmul.f32 %v734, %v735
    %v738 = vsub.f32 %v721, %v736
    %v739 = vsub.f32 %v722, %v737
    %v740 = vmul.f32 %v738, %v738
    %v741 = vmul.f32 %v739, %v739
    %v742 = vrot.slane %v740, 4
    %v743 = vadd.f32 %v740, %v742
    %v744 = vrot.slane %v743, 2
    %v745 = vadd.f32 %v743, %v744
    %v746 = vrot.slane %v745, 1
    %v747 = vadd.f32 %v745, %v746
    %v748 = vrot.slane %v741, 4
    %v749 = vadd.f32 %v741, %v748
    %v750 = vrot.slane %v749, 2
    %v751 = vadd.f32 %v749, %v750
    %v752 = vrot.slane %v751, 1
    %v753 = vadd.f32 %v751, %v752
    %v754 = vmul.f32 %v747, %v735
    %v755 = vmul.f32 %v753, %v735
    %v756 = vadd.f32 %v754, 1e-05
    %v757 = vadd.f32 %v755, 1e-05
    %v758 = vrsqrt.pop %v756
    %v759 = vrsqrt.pop %v757
    %v760 = vmul.f32 %v738, %v758
    %v761 = vmul.f32 %v739, %v759
    %v762 = vld [vmem:[%s5] sm:$0x1]
    %v764 = vlaneseq
    %v765 = vshrl.u32 %v764, 7
    %v766 = vsub.s32 0, %v765
    %v767 = vrot.slane %v762, %v766
    %v769 = vmul.f32 %v760, %v767
    %v770 = vmul.f32 %v761, %v767
    %v771 = vld [vmem:[%s6] sm:$0x1]
    %v773 = vlaneseq
    %v774 = vshrl.u32 %v773, 7
    %v775 = vsub.s32 0, %v774
    %v776 = vrot.slane %v771, %v775
    %v778 = vadd.f32 %v769, %v776
    %v779 = vadd.f32 %v770, %v776
    %v780 = vld [vmem:[%s10] sm:$0xff]
    %v781 = vld [vmem:[%s10 + $0x8] sm:$0xff]
    %v782 = vld [vmem:[%s10 + $0x10] sm:$0xff]
    %v783 = vld [vmem:[%s10 + $0x18] sm:$0xff]
    %v784 = vld [vmem:[%s10 + $0x20] sm:$0xff]
    %v785 = vld [vmem:[%s10 + $0x28] sm:$0xff]
    %v786 = vld [vmem:[%s10 + $0x30] sm:$0xff]
    %v787 = vld [vmem:[%s10 + $0x38] sm:$0xff]
    %v788 = vld [vmem:[%s10 + $0x40] sm:$0xff]
    %v789 = vld [vmem:[%s10 + $0x48] sm:$0xff]
    %v790 = vld [vmem:[%s10 + $0x50] sm:$0xff]
    %v791 = vld [vmem:[%s10 + $0x58] sm:$0xff]
    %v792 = vld [vmem:[%s10 + $0x60] sm:$0xff]
    %v793 = vld [vmem:[%s10 + $0x68] sm:$0xff]
    %v794 = vld [vmem:[%s10 + $0x70] sm:$0xff]
    %v795 = vld [vmem:[%s10 + $0x78] sm:$0xff]
    %796 = vmatprep.subr.mxu0 0.0
    %797 = vmatpush1.msra.mxu0 %v780
    %798 = vmatprep.subr.mxu0 0.0
    %799 = vmatpush1.msra.mxu0 %v781
    %800 = vmatprep.subr.mxu0 0.0
    %801 = vmatpush1.msra.mxu0 %v782
    %802 = vmatprep.subr.mxu0 0.0
    %803 = vmatpush1.msra.mxu0 %v783
    %804 = vmatprep.subr.mxu0 0.0
    %805 = vmatpush1.msra.mxu0 %v784
    %806 = vmatprep.subr.mxu0 0.0
    %807 = vmatpush1.msra.mxu0 %v785
    %808 = vmatprep.subr.mxu0 0.0
    %809 = vmatpush1.msra.mxu0 %v786
    %810 = vmatprep.subr.mxu0 0.0
    %811 = vmatpush1.msra.mxu0 %v787
    %812 = vmatprep.subr.mxu0 0.0
    %813 = vmatpush1.msra.mxu0 %v788
    %814 = vmatprep.subr.mxu0 0.0
    %815 = vmatpush1.msra.mxu0 %v789
    %816 = vmatprep.subr.mxu0 0.0
    %817 = vmatpush1.msra.mxu0 %v790
    %818 = vmatprep.subr.mxu0 0.0
    %819 = vmatpush1.msra.mxu0 %v791
    %820 = vmatprep.subr.mxu0 0.0
    %821 = vmatpush1.msra.mxu0 %v792
    %822 = vmatprep.subr.mxu0 0.0
    %823 = vmatpush1.msra.mxu0 %v793
    %824 = vmatprep.subr.mxu0 0.0
    %825 = vmatpush1.msra.mxu0 %v794
    %826 = vmatprep.subr.mxu0 0.0
    %827 = vmatpush1.msra.mxu0 %v795
    %828 = vmatprep.subr.mxu0 0.0
    %829 = vmatpush1.msra.mxu0 0.0
    %830 = vmatprep.subr.mxu0 0.0
    %831 = vmatpush1.msra.mxu0 0.0
    %832 = vmatprep.subr.mxu0 0.0
    %833 = vmatpush1.msra.mxu0 0.0
    %834 = vmatprep.subr.mxu0 0.0
    %835 = vmatpush1.msra.mxu0 0.0
    %836 = vmatprep.subr.mxu0 0.0
    %837 = vmatpush1.msra.mxu0 0.0
    %838 = vmatprep.subr.mxu0 0.0
    %839 = vmatpush1.msra.mxu0 0.0
    %840 = vmatprep.subr.mxu0 0.0
    %841 = vmatpush1.msra.mxu0 0.0
    %842 = vmatprep.subr.mxu0 0.0
    %843 = vmatpush1.msra.mxu0 0.0
    %844 = vmatprep.subr.mxu0 0.0
    %845 = vmatpush1.msra.mxu0 0.0
    %846 = vmatprep.subr.mxu0 0.0
    %847 = vmatpush1.msra.mxu0 0.0
    %848 = vmatprep.subr.mxu0 0.0
    %849 = vmatpush1.msra.mxu0 0.0
    %850 = vmatprep.subr.mxu0 0.0
    %851 = vmatpush1.msra.mxu0 0.0
    %852 = vmatprep.subr.mxu0 0.0
    %853 = vmatpush1.msra.mxu0 0.0
    %854 = vmatprep.subr.mxu0 0.0
    %855 = vmatpush1.msra.mxu0 0.0
    %856 = vmatprep.subr.mxu0 0.0
    %857 = vmatpush1.msra.mxu0 0.0
    %858 = vmatprep.subr.mxu0 0.0
    %859 = vmatpush1.msra.mxu0 0.0
    %860 = vmatprep.mubr.f32.mxu0 0.0
    %861 = vmatmul.mubr.f32.gmra.mrb[0].mxu0 %v778
    %v862 = vpop.f32.mrb[0].mxu0
    %v863 = vadd.f32 0.0, %v862
    %v864 = vpop.f32.mrb[0].mxu0
    %865 = vmatprep.mubr.f32.mxu0 0.0
    %866 = vmatmul.mubr.f32.gmra.mrb[0].mxu0 %v779
    %v867 = vpop.f32.mrb[0].mxu0
    %v868 = vadd.f32 0.0, %v867
    %v869 = vpop.f32.mrb[0].mxu0
    %870 = vdwg.mxu0
    %v871 = vlaneseq
    %v872 = vand.u32 %v871, 127
    %vm873 = vcmask 31744
    %v874 = vsel %vm873, %v863, -inf
    %875 = vmax.xlane.f32.xlu0 %v874
    %v876 = vpop.xlane.xlu0 %875
    %v877 = vsel %vm873, %v868, -inf
    %878 = vmax.xlane.f32.xlu0 %v877
    %v879 = vpop.xlane.xlu0 %878
    %vm880 = vcmp.eq.f32.partialorder %v863, %v876
    %vm881 = vcmp.eq.f32.partialorder %v868, %v879
    %v882 = vsel %vm880, %v872, 4
    %v883 = vsel %vm881, %v872, 4
    %v884 = vsel %vm873, %v882, 2147483647
    %v885 = vand.u32 %v884, 65535
    %v886 = vshra.s32 %v884, 16
    %v887 = vcvt.s32.f32 %v885
    %v888 = vcvt.s32.f32 %v886
    %889 = vmin.xlane.f32.xlu0 %v888
    %v890 = vpop.xlane.xlu0 %889
    %vm891 = vcmp.eq.f32.partialorder %v888, %v890
    %v892 = vsel %vm891, %v887, inf
    %893 = vmin.xlane.f32.xlu0 %v892
    %v894 = vpop.xlane.xlu0 %893
    %v895 = vcvt.f32.s32 %v894
    %v896 = vcvt.f32.s32 %v890
    %v897 = vshll.u32 %v896, 16
    %v898 = vadd.s32 %v897, %v895
    %v899 = vsel %vm873, %v883, 2147483647
    %v900 = vand.u32 %v899, 65535
    %v901 = vshra.s32 %v899, 16
    %v902 = vcvt.s32.f32 %v900
    %v903 = vcvt.s32.f32 %v901
    %904 = vmin.xlane.f32.xlu0 %v903
    %v905 = vpop.xlane.xlu0 %904
    %vm906 = vcmp.eq.f32.partialorder %v903, %v905
    %v907 = vsel %vm906, %v902, inf
    %908 = vmin.xlane.f32.xlu0 %v907
    %v909 = vpop.xlane.xlu0 %908
    %v910 = vcvt.f32.s32 %v909
    %v911 = vcvt.f32.s32 %v905
    %v912 = vshll.u32 %v911, 16
    %v913 = vadd.s32 %v912, %v910
    %vm914 = vcmp.eq.s32.totalorder %v872, %v898
    %vm915 = vcmp.eq.s32.totalorder %v872, %v913
    %v916 = vsel %vm914, -inf, %v863
    %v917 = vsel %vm915, -inf, %v868
    %v918 = vsel %vm873, %v916, -inf
    %919 = vmax.xlane.f32.xlu0 %v918
    %v920 = vpop.xlane.xlu0 %919
    %v921 = vsel %vm873, %v917, -inf
    %922 = vmax.xlane.f32.xlu0 %v921
    %v923 = vpop.xlane.xlu0 %922
    %vm924 = vcmp.eq.f32.partialorder %v916, %v920
    %vm925 = vcmp.eq.f32.partialorder %v917, %v923
    %v926 = vsel %vm924, %v872, 4
    %v927 = vsel %vm925, %v872, 4
    %v928 = vsel %vm873, %v926, 2147483647
    %v929 = vand.u32 %v928, 65535
    %v930 = vshra.s32 %v928, 16
    %v931 = vcvt.s32.f32 %v929
    %v932 = vcvt.s32.f32 %v930
    %933 = vmin.xlane.f32.xlu0 %v932
    %v934 = vpop.xlane.xlu0 %933
    %vm935 = vcmp.eq.f32.partialorder %v932, %v934
    %v936 = vsel %vm935, %v931, inf
    %937 = vmin.xlane.f32.xlu0 %v936
    %v938 = vpop.xlane.xlu0 %937
    %v939 = vcvt.f32.s32 %v938
    %v940 = vcvt.f32.s32 %v934
    %v941 = vshll.u32 %v940, 16
    %v942 = vadd.s32 %v941, %v939
    %v943 = vsel %vm873, %v927, 2147483647
    %v944 = vand.u32 %v943, 65535
    %v945 = vshra.s32 %v943, 16
    %v946 = vcvt.s32.f32 %v944
    %v947 = vcvt.s32.f32 %v945
    %948 = vmin.xlane.f32.xlu0 %v947
    %v949 = vpop.xlane.xlu0 %948
    %vm950 = vcmp.eq.f32.partialorder %v947, %v949
    %v951 = vsel %vm950, %v946, inf
    %952 = vmin.xlane.f32.xlu0 %v951
    %v953 = vpop.xlane.xlu0 %952
    %v954 = vcvt.f32.s32 %v953
    %v955 = vcvt.f32.s32 %v949
    %v956 = vshll.u32 %v955, 16
    %v957 = vadd.s32 %v956, %v954
    %vm958 = vcmp.eq.s32.totalorder %v872, %v942
    %vm959 = vcmp.eq.s32.totalorder %v872, %v957
    %v960 = vsub.f32 %v920, %v876
    %v961 = vsub.f32 %v923, %v879
    %v962 = vmul.f32 %v960, 1.442695
    %v963 = vpow.pop %v962
    %v964 = vmul.f32 %v961, 1.442695
    %v965 = vpow.pop %v964
    %v966 = vadd.f32 %v963, 1.0
    %v967 = vadd.f32 %v965, 1.0
    %v968 = vsel %vm914, 1.0, 0.0
    %v969 = vsel %vm915, 1.0, 0.0
    %v970 = vsel %vm958, %v963, 0.0
    %v971 = vsel %vm959, %v965, 0.0
    %v972 = vadd.f32 %v968, %v970
    %v973 = vadd.f32 %v969, %v971
    %v974 = vrcp.pop %v966
    %v975 = vmul.f32 %v972, %v974
    %v976 = vrcp.pop %v967
    %v977 = vmul.f32 %v973, %v976
    %v978 = vpack.c.bf16 %v779, %v778
    %v979 = vld [vmem:[#allocation2] sm:$0xff]
    %v980 = vld [vmem:[#allocation2 + $0x8] sm:$0xff]
    %v981 = vld [vmem:[#allocation2 + $0x10] sm:$0xff]
    %v982 = vld [vmem:[#allocation2 + $0x18] sm:$0xff]
    %v983 = vld [vmem:[#allocation2 + $0x20] sm:$0xff]
    %v984 = vld [vmem:[#allocation2 + $0x28] sm:$0xff]
    %v985 = vld [vmem:[#allocation2 + $0x30] sm:$0xff]
    %v986 = vld [vmem:[#allocation2 + $0x38] sm:$0xff]
    %v987 = vld [vmem:[#allocation2 + $0x40] sm:$0xff]
    %v988 = vld [vmem:[#allocation2 + $0x48] sm:$0xff]
    %v989 = vld [vmem:[#allocation2 + $0x50] sm:$0xff]
    %v990 = vld [vmem:[#allocation2 + $0x58] sm:$0xff]
    %v991 = vld [vmem:[#allocation2 + $0x60] sm:$0xff]
    %v992 = vld [vmem:[#allocation2 + $0x68] sm:$0xff]
    %v993 = vld [vmem:[#allocation2 + $0x70] sm:$0xff]
    %v994 = vld [vmem:[#allocation2 + $0x78] sm:$0xff]
    %v995 = vld [vmem:[%s12] sm:$0x3]
    %v997 = vlaneseq
    %v998 = vshrl.u32 %v997, 7
    %v999 = vsub.s32 0, %v998
    %v1000 = vrot.slane %v995, %v999
    %v1001 = vlaneseq
    %v1002 = vshrl.u32 %v1001, 7
    %v1003 = vsub.s32 1, %v1002
    %v1004 = vrot.slane %v995, %v1003
    %v1023 = vunpack.c.l.b16 %v979
    %v1024 = vunpack.c.h.b16 %v979
    %v1025 = vunpack.c.l.b16 %v980
    %v1026 = vunpack.c.h.b16 %v980
    %v1027 = vunpack.c.l.b16 %v981
    %v1028 = vunpack.c.h.b16 %v981
    %v1029 = vunpack.c.l.b16 %v982
    %v1030 = vunpack.c.h.b16 %v982
    %v1031 = vunpack.c.l.b16 %v983
    %v1032 = vunpack.c.h.b16 %v983
    %v1033 = vunpack.c.l.b16 %v984
    %v1034 = vunpack.c.h.b16 %v984
    %v1035 = vunpack.c.l.b16 %v985
    %v1036 = vunpack.c.h.b16 %v985
    %v1037 = vunpack.c.l.b16 %v986
    %v1038 = vunpack.c.h.b16 %v986
    %v1039 = vunpack.c.l.b16 %v987
    %v1040 = vunpack.c.h.b16 %v987
    %v1041 = vunpack.c.l.b16 %v988
    %v1042 = vunpack.c.h.b16 %v988
    %v1043 = vunpack.c.l.b16 %v989
    %v1044 = vunpack.c.h.b16 %v989
    %v1045 = vunpack.c.l.b16 %v990
    %v1046 = vunpack.c.h.b16 %v990
    %v1047 = vunpack.c.l.b16 %v991
    %v1048 = vunpack.c.h.b16 %v991
    %v1049 = vunpack.c.l.b16 %v992
    %v1050 = vunpack.c.h.b16 %v992
    %v1051 = vunpack.c.l.b16 %v993
    %v1052 = vunpack.c.h.b16 %v993
    %v1053 = vunpack.c.l.b16 %v994
    %v1054 = vunpack.c.h.b16 %v994
    %v1055 = vpack.c.b16 %v1025, %v1023
    %v1056 = vpack.c.b16 %v1026, %v1024
    %v1057 = vpack.c.b16 %v1029, %v1027
    %v1058 = vpack.c.b16 %v1030, %v1028
    %v1059 = vpack.c.b16 %v1033, %v1031
    %v1060 = vpack.c.b16 %v1034, %v1032
    %v1061 = vpack.c.b16 %v1037, %v1035
    %v1062 = vpack.c.b16 %v1038, %v1036
    %v1063 = vpack.c.b16 %v1041, %v1039
    %v1064 = vpack.c.b16 %v1042, %v1040
    %v1065 = vpack.c.b16 %v1045, %v1043
    %v1066 = vpack.c.b16 %v1046, %v1044
    %v1067 = vpack.c.b16 %v1049, %v1047
    %v1068 = vpack.c.b16 %v1050, %v1048
    %v1069 = vpack.c.b16 %v1053, %v1051
    %v1070 = vpack.c.b16 %v1054, %v1052
    %1087 = vmatprep.subr.bf16.mxu0 %v1056
    %1088 = vmatpush1.bf16.msra.mxu0 %v1055
    %1089 = vmatprep.subr.bf16.mxu0 %v1058
    %1090 = vmatpush1.bf16.msra.mxu0 %v1057
    %1091 = vmatprep.subr.bf16.mxu0 %v1060
    %1092 = vmatpush1.bf16.msra.mxu0 %v1059
    %1093 = vmatprep.subr.bf16.mxu0 %v1062
    %1094 = vmatpush1.bf16.msra.mxu0 %v1061
    %1095 = vmatprep.subr.bf16.mxu0 %v1064
    %1096 = vmatpush1.bf16.msra.mxu0 %v1063
    %1097 = vmatprep.subr.bf16.mxu0 %v1066
    %1098 = vmatpush1.bf16.msra.mxu0 %v1065
    %1099 = vmatprep.subr.bf16.mxu0 %v1068
    %1100 = vmatpush1.bf16.msra.mxu0 %v1067
    %1101 = vmatprep.subr.bf16.mxu0 %v1070
    %1102 = vmatpush1.bf16.msra.mxu0 %v1069
    %1103 = vmatprep.subr.bf16.mxu0 0
    %1104 = vmatpush1.bf16.msra.mxu0 0
    %1105 = vmatprep.subr.bf16.mxu0 0
    %1106 = vmatpush1.bf16.msra.mxu0 0
    %1107 = vmatprep.subr.bf16.mxu0 0
    %1108 = vmatpush1.bf16.msra.mxu0 0
    %1109 = vmatprep.subr.bf16.mxu0 0
    %1110 = vmatpush1.bf16.msra.mxu0 0
    %1111 = vmatprep.subr.bf16.mxu0 0
    %1112 = vmatpush1.bf16.msra.mxu0 0
    %1113 = vmatprep.subr.bf16.mxu0 0
    %1114 = vmatpush1.bf16.msra.mxu0 0
    %1115 = vmatprep.subr.bf16.mxu0 0
    %1116 = vmatpush1.bf16.msra.mxu0 0
    %1117 = vmatprep.subr.bf16.mxu0 0
    %1118 = vmatpush1.bf16.msra.mxu0 0
    %1119 = vmatprep.mubr.bf16.mxu0 0
    %1120 = vmatmul.mubr.bf16.gmra.mrb[0].mxu0 %v978
    %v1121 = vpop.f32.mrb[0].mxu0
    %v1122 = vadd.f32 %v1000, %v1121
    %v1123 = vpop.f32.mrb[0].mxu0
    %v1124 = vadd.f32 %v1004, %v1123
    %v1125 = vpop.f32.mrb[0].mxu0
    %v1126 = vadd.f32 %v1000, %v1125
    %v1127 = vpop.f32.mrb[0].mxu0
    %v1128 = vadd.f32 %v1004, %v1127
    %1129 = vdwg.mxu0
    %v1130 = vmax.f32 %v1122, 0.0
    %v1131 = vmax.f32 %v1124, 0.0
    %v1132 = vmax.f32 %v1126, 0.0
    %v1133 = vmax.f32 %v1128, 0.0
    %v1134 = vld [vmem:[%s13] sm:$0xff]
    %v1136 = vcombine.high %v1134, %v1134
    %v1138 = vsel %vm873, %v975, 0
    %v1141 = vsel %vm873, %v977, 0
    %vm1143 = vcmask 1043456
    %v1144 = vsel %vm1143, %v1134, 0
    %v1146 = vsel %vm1143, %v1136, 0
    %1148 = vmatprep.subr.mxu0 %v1146
    %1149 = vmatpush1.msra.mxu0 %v1144
    %1150 = vmatprep.subr.mxu0 0.0
    %1151 = vmatpush1.msra.mxu0 0.0
    %1152 = vmatprep.subr.mxu0 0.0
    %1153 = vmatpush1.msra.mxu0 0.0
    %1154 = vmatprep.subr.mxu0 0.0
    %1155 = vmatpush1.msra.mxu0 0.0
    %1156 = vmatprep.subr.mxu0 0.0
    %1157 = vmatpush1.msra.mxu0 0.0
    %1158 = vmatprep.subr.mxu0 0.0
    %1159 = vmatpush1.msra.mxu0 0.0
    %1160 = vmatprep.subr.mxu0 0.0
    %1161 = vmatpush1.msra.mxu0 0.0
    %1162 = vmatprep.subr.mxu0 0.0
    %1163 = vmatpush1.msra.mxu0 0.0
    %1164 = vmatprep.subr.mxu0 0.0
    %1165 = vmatpush1.msra.mxu0 0.0
    %1166 = vmatprep.subr.mxu0 0.0
    %1167 = vmatpush1.msra.mxu0 0.0
    %1168 = vmatprep.subr.mxu0 0.0
    %1169 = vmatpush1.msra.mxu0 0.0
    %1170 = vmatprep.subr.mxu0 0.0
    %1171 = vmatpush1.msra.mxu0 0.0
    %1172 = vmatprep.subr.mxu0 0.0
    %1173 = vmatpush1.msra.mxu0 0.0
    %1174 = vmatprep.subr.mxu0 0.0
    %1175 = vmatpush1.msra.mxu0 0.0
    %1176 = vmatprep.subr.mxu0 0.0
    %1177 = vmatpush1.msra.mxu0 0.0
    %1178 = vmatprep.subr.mxu0 0.0
    %1179 = vmatpush1.msra.mxu0 0.0
    %1180 = vmatprep.subr.mxu0 0.0
    %1181 = vmatpush1.msra.mxu0 0.0
    %1182 = vmatprep.subr.mxu0 0.0
    %1183 = vmatpush1.msra.mxu0 0.0
    %1184 = vmatprep.subr.mxu0 0.0
    %1185 = vmatpush1.msra.mxu0 0.0
    %1186 = vmatprep.subr.mxu0 0.0
    %1187 = vmatpush1.msra.mxu0 0.0
    %1188 = vmatprep.subr.mxu0 0.0
    %1189 = vmatpush1.msra.mxu0 0.0
    %1190 = vmatprep.subr.mxu0 0.0
    %1191 = vmatpush1.msra.mxu0 0.0
    %1192 = vmatprep.subr.mxu0 0.0
    %1193 = vmatpush1.msra.mxu0 0.0
    %1194 = vmatprep.subr.mxu0 0.0
    %1195 = vmatpush1.msra.mxu0 0.0
    %1196 = vmatprep.subr.mxu0 0.0
    %1197 = vmatpush1.msra.mxu0 0.0
    %1198 = vmatprep.subr.mxu0 0.0
    %1199 = vmatpush1.msra.mxu0 0.0
    %1200 = vmatprep.subr.mxu0 0.0
    %1201 = vmatpush1.msra.mxu0 0.0
    %1202 = vmatprep.subr.mxu0 0.0
    %1203 = vmatpush1.msra.mxu0 0.0
    %1204 = vmatprep.subr.mxu0 0.0
    %1205 = vmatpush1.msra.mxu0 0.0
    %1206 = vmatprep.subr.mxu0 0.0
    %1207 = vmatpush1.msra.mxu0 0.0
    %1208 = vmatprep.subr.mxu0 0.0
    %1209 = vmatpush1.msra.mxu0 0.0
    %1210 = vmatprep.subr.mxu0 0.0
    %1211 = vmatpush1.msra.mxu0 0.0
    %1212 = vmatprep.mubr.f32.mxu0 0.0
    %1213 = vmatmul.mubr.f32.gmra.mrb[0].mxu0 %v1138
    %v1214 = vpop.f32.mrb[0].mxu0
    %v1215 = vadd.f32 0.0, %v1214
    %v1216 = vpop.f32.mrb[0].mxu0
    %v1217 = vadd.f32 0.0, %v1216
    %1218 = vmatprep.mubr.f32.mxu0 0.0
    %1219 = vmatmul.mubr.f32.gmra.mrb[0].mxu0 %v1141
    %v1220 = vpop.f32.mrb[0].mxu0
    %v1221 = vadd.f32 0.0, %v1220
    %v1222 = vpop.f32.mrb[0].mxu0
    %v1223 = vadd.f32 0.0, %v1222
    %1224 = vdwg.mxu0
    %v1225 = vmul.f32 %v1130, %v1215
    %v1226 = vmul.f32 %v1131, %v1217
    %v1227 = vmul.f32 %v1132, %v1221
    %v1228 = vmul.f32 %v1133, %v1223
    %v1229 = vpack.c.bf16 %v1227, %v1225
    %v1230 = vpack.c.bf16 %v1228, %v1226
    %v1231 = vld [vmem:[#allocation5] sm:$0xf]
    %v1232 = vld [vmem:[#allocation5 + $0x4] sm:$0xf]
    %v1233 = vld [vmem:[#allocation5 + $0x8] sm:$0xf]
    %v1234 = vld [vmem:[#allocation5 + $0xc] sm:$0xf]
    %v1235 = vld [vmem:[#allocation5 + $0x10] sm:$0xf]
    %v1236 = vld [vmem:[#allocation5 + $0x14] sm:$0xf]
    %v1237 = vld [vmem:[#allocation5 + $0x18] sm:$0xf]
    %v1238 = vld [vmem:[#allocation5 + $0x1c] sm:$0xf]
    %v1239 = vld [vmem:[#allocation5 + $0x20] sm:$0xf]
    %v1240 = vld [vmem:[#allocation5 + $0x24] sm:$0xf]
    %v1241 = vld [vmem:[#allocation5 + $0x28] sm:$0xf]
    %v1242 = vld [vmem:[#allocation5 + $0x2c] sm:$0xf]
    %v1243 = vld [vmem:[#allocation5 + $0x30] sm:$0xf]
    %v1244 = vld [vmem:[#allocation5 + $0x34] sm:$0xf]
    %v1245 = vld [vmem:[#allocation5 + $0x38] sm:$0xf]
    %v1246 = vld [vmem:[#allocation5 + $0x3c] sm:$0xf]
    %v1247 = vld [vmem:[#allocation5 + $0x40] sm:$0xf]
    %v1248 = vld [vmem:[#allocation5 + $0x44] sm:$0xf]
    %v1249 = vld [vmem:[#allocation5 + $0x48] sm:$0xf]
    %v1250 = vld [vmem:[#allocation5 + $0x4c] sm:$0xf]
    %v1251 = vld [vmem:[#allocation5 + $0x50] sm:$0xf]
    %v1252 = vld [vmem:[#allocation5 + $0x54] sm:$0xf]
    %v1253 = vld [vmem:[#allocation5 + $0x58] sm:$0xf]
    %v1254 = vld [vmem:[#allocation5 + $0x5c] sm:$0xf]
    %v1255 = vld [vmem:[#allocation5 + $0x60] sm:$0xf]
    %v1256 = vld [vmem:[#allocation5 + $0x64] sm:$0xf]
    %v1257 = vld [vmem:[#allocation5 + $0x68] sm:$0xf]
    %v1258 = vld [vmem:[#allocation5 + $0x6c] sm:$0xf]
    %v1259 = vld [vmem:[#allocation5 + $0x70] sm:$0xf]
    %v1260 = vld [vmem:[#allocation5 + $0x74] sm:$0xf]
    %v1261 = vld [vmem:[#allocation5 + $0x78] sm:$0xf]
    %v1262 = vld [vmem:[#allocation5 + $0x7c] sm:$0xf]
    %v1263 = vld [vmem:[%s15] sm:$0xf]
    %v1265 = vsel %vm1143, %v1263, 0
    %1267 = vmatprep.subr.mxu0 0.0
    %1268 = vmatpush1.msra.mxu0 %v1265
    %1269 = vmatprep.subr.mxu0 0.0
    %1270 = vmatpush1.msra.mxu0 0.0
    %1271 = vmatprep.subr.mxu0 0.0
    %1272 = vmatpush1.msra.mxu0 0.0
    %1273 = vmatprep.subr.mxu0 0.0
    %1274 = vmatpush1.msra.mxu0 0.0
    %1275 = vmatprep.subr.mxu0 0.0
    %1276 = vmatpush1.msra.mxu0 0.0
    %1277 = vmatprep.subr.mxu0 0.0
    %1278 = vmatpush1.msra.mxu0 0.0
    %1279 = vmatprep.subr.mxu0 0.0
    %1280 = vmatpush1.msra.mxu0 0.0
    %1281 = vmatprep.subr.mxu0 0.0
    %1282 = vmatpush1.msra.mxu0 0.0
    %1283 = vmatprep.subr.mxu0 0.0
    %1284 = vmatpush1.msra.mxu0 0.0
    %1285 = vmatprep.subr.mxu0 0.0
    %1286 = vmatpush1.msra.mxu0 0.0
    %1287 = vmatprep.subr.mxu0 0.0
    %1288 = vmatpush1.msra.mxu0 0.0
    %1289 = vmatprep.subr.mxu0 0.0
    %1290 = vmatpush1.msra.mxu0 0.0
    %1291 = vmatprep.subr.mxu0 0.0
    %1292 = vmatpush1.msra.mxu0 0.0
    %1293 = vmatprep.subr.mxu0 0.0
    %1294 = vmatpush1.msra.mxu0 0.0
    %1295 = vmatprep.subr.mxu0 0.0
    %1296 = vmatpush1.msra.mxu0 0.0
    %1297 = vmatprep.subr.mxu0 0.0
    %1298 = vmatpush1.msra.mxu0 0.0
    %1299 = vmatprep.subr.mxu0 0.0
    %1300 = vmatpush1.msra.mxu0 0.0
    %1301 = vmatprep.subr.mxu0 0.0
    %1302 = vmatpush1.msra.mxu0 0.0
    %1303 = vmatprep.subr.mxu0 0.0
    %1304 = vmatpush1.msra.mxu0 0.0
    %1305 = vmatprep.subr.mxu0 0.0
    %1306 = vmatpush1.msra.mxu0 0.0
    %1307 = vmatprep.subr.mxu0 0.0
    %1308 = vmatpush1.msra.mxu0 0.0
    %1309 = vmatprep.subr.mxu0 0.0
    %1310 = vmatpush1.msra.mxu0 0.0
    %1311 = vmatprep.subr.mxu0 0.0
    %1312 = vmatpush1.msra.mxu0 0.0
    %1313 = vmatprep.subr.mxu0 0.0
    %1314 = vmatpush1.msra.mxu0 0.0
    %1315 = vmatprep.subr.mxu0 0.0
    %1316 = vmatpush1.msra.mxu0 0.0
    %1317 = vmatprep.subr.mxu0 0.0
    %1318 = vmatpush1.msra.mxu0 0.0
    %1319 = vmatprep.subr.mxu0 0.0
    %1320 = vmatpush1.msra.mxu0 0.0
    %1321 = vmatprep.subr.mxu0 0.0
    %1322 = vmatpush1.msra.mxu0 0.0
    %1323 = vmatprep.subr.mxu0 0.0
    %1324 = vmatpush1.msra.mxu0 0.0
    %1325 = vmatprep.subr.mxu0 0.0
    %1326 = vmatpush1.msra.mxu0 0.0
    %1327 = vmatprep.subr.mxu0 0.0
    %1328 = vmatpush1.msra.mxu0 0.0
    %1329 = vmatprep.subr.mxu0 0.0
    %1330 = vmatpush1.msra.mxu0 0.0
    %1331 = vmatprep.mubr.f32.mxu0 0.0
    %1332 = vmatmul.mubr.f32.gmra.mrb[0].mxu0 %v1138
    %v1333 = vpop.f32.mrb[0].mxu0
    %v1334 = vadd.f32 0.0, %v1333
    %v1335 = vpop.f32.mrb[0].mxu0
    %1336 = vmatprep.mubr.f32.mxu0 0.0
    %1337 = vmatmul.mubr.f32.gmra.mrb[0].mxu0 %v1141
    %v1338 = vpop.f32.mrb[0].mxu0
    %v1339 = vadd.f32 0.0, %v1338
    %v1340 = vpop.f32.mrb[0].mxu0
    %1341 = vdwg.mxu0
    %v1374 = vunpack.c.l.b16 %v1231
    %v1375 = vunpack.c.l.b16 %v1232
    %v1376 = vunpack.c.l.b16 %v1233
    %v1377 = vunpack.c.l.b16 %v1234
    %v1378 = vunpack.c.l.b16 %v1235
    %v1379 = vunpack.c.l.b16 %v1236
    %v1380 = vunpack.c.l.b16 %v1237
    %v1381 = vunpack.c.l.b16 %v1238
    %v1382 = vunpack.c.l.b16 %v1239
    %v1383 = vunpack.c.l.b16 %v1240
    %v1384 = vunpack.c.l.b16 %v1241
    %v1385 = vunpack.c.l.b16 %v1242
    %v1386 = vunpack.c.l.b16 %v1243
    %v1387 = vunpack.c.l.b16 %v1244
    %v1388 = vunpack.c.l.b16 %v1245
    %v1389 = vunpack.c.l.b16 %v1246
    %v1390 = vunpack.c.l.b16 %v1247
    %v1391 = vunpack.c.l.b16 %v1248
    %v1392 = vunpack.c.l.b16 %v1249
    %v1393 = vunpack.c.l.b16 %v1250
    %v1394 = vunpack.c.l.b16 %v1251
    %v1395 = vunpack.c.l.b16 %v1252
    %v1396 = vunpack.c.l.b16 %v1253
    %v1397 = vunpack.c.l.b16 %v1254
    %v1398 = vunpack.c.l.b16 %v1255
    %v1399 = vunpack.c.l.b16 %v1256
    %v1400 = vunpack.c.l.b16 %v1257
    %v1401 = vunpack.c.l.b16 %v1258
    %v1402 = vunpack.c.l.b16 %v1259
    %v1403 = vunpack.c.l.b16 %v1260
    %v1404 = vunpack.c.l.b16 %v1261
    %v1405 = vunpack.c.l.b16 %v1262
    %v1406 = vpack.c.b16 %v1375, %v1374
    %v1407 = vpack.c.b16 %v1377, %v1376
    %v1408 = vpack.c.b16 %v1379, %v1378
    %v1409 = vpack.c.b16 %v1381, %v1380
    %v1410 = vpack.c.b16 %v1383, %v1382
    %v1411 = vpack.c.b16 %v1385, %v1384
    %v1412 = vpack.c.b16 %v1387, %v1386
    %v1413 = vpack.c.b16 %v1389, %v1388
    %v1414 = vpack.c.b16 %v1391, %v1390
    %v1415 = vpack.c.b16 %v1393, %v1392
    %v1416 = vpack.c.b16 %v1395, %v1394
    %v1417 = vpack.c.b16 %v1397, %v1396
    %v1418 = vpack.c.b16 %v1399, %v1398
    %v1419 = vpack.c.b16 %v1401, %v1400
    %v1420 = vpack.c.b16 %v1403, %v1402
    %v1421 = vpack.c.b16 %v1405, %v1404
    %1438 = vmatprep.subr.bf16.mxu0 0
    %1439 = vmatpush1.bf16.msra.mxu0 %v1406
    %1440 = vmatprep.subr.bf16.mxu0 0
    %1441 = vmatpush1.bf16.msra.mxu0 %v1407
    %1442 = vmatprep.subr.bf16.mxu0 0
    %1443 = vmatpush1.bf16.msra.mxu0 %v1408
    %1444 = vmatprep.subr.bf16.mxu0 0
    %1445 = vmatpush1.bf16.msra.mxu0 %v1409
    %1446 = vmatprep.subr.bf16.mxu0 0
    %1447 = vmatpush1.bf16.msra.mxu0 %v1410
    %1448 = vmatprep.subr.bf16.mxu0 0
    %1449 = vmatpush1.bf16.msra.mxu0 %v1411
    %1450 = vmatprep.subr.bf16.mxu0 0
    %1451 = vmatpush1.bf16.msra.mxu0 %v1412
    %1452 = vmatprep.subr.bf16.mxu0 0
    %1453 = vmatpush1.bf16.msra.mxu0 %v1413
    %1454 = vmatprep.subr.bf16.mxu0 0
    %1455 = vmatpush1.bf16.msra.mxu0 %v1414
    %1456 = vmatprep.subr.bf16.mxu0 0
    %1457 = vmatpush1.bf16.msra.mxu0 %v1415
    %1458 = vmatprep.subr.bf16.mxu0 0
    %1459 = vmatpush1.bf16.msra.mxu0 %v1416
    %1460 = vmatprep.subr.bf16.mxu0 0
    %1461 = vmatpush1.bf16.msra.mxu0 %v1417
    %1462 = vmatprep.subr.bf16.mxu0 0
    %1463 = vmatpush1.bf16.msra.mxu0 %v1418
    %1464 = vmatprep.subr.bf16.mxu0 0
    %1465 = vmatpush1.bf16.msra.mxu0 %v1419
    %1466 = vmatprep.subr.bf16.mxu0 0
    %1467 = vmatpush1.bf16.msra.mxu0 %v1420
    %1468 = vmatprep.subr.bf16.mxu0 0
    %1469 = vmatpush1.bf16.msra.mxu0 %v1421
    %1470 = vmatprep.mubr.bf16.mxu0 %v1230
    %1471 = vmatmul.mubr.bf16.gmra.mrb[0].mxu0 %v1229
    %v1472 = vpop.f32.mrb[0].mxu0
    %v1473 = vadd.f32 %v1334, %v1472
    %v1474 = vpop.f32.mrb[0].mxu0
    %v1475 = vpop.f32.mrb[0].mxu0
    %v1476 = vadd.f32 %v1339, %v1475
    %v1477 = vpop.f32.mrb[0].mxu0
    %1478 = vdwg.mxu0
    %v1479 = vadd.f32 %v1473, %v778
    %v1480 = vadd.f32 %v1476, %v779
    %v1481 = vrot.slane %v1479, 4
    %v1482 = vadd.f32 %v1479, %v1481
    %v1483 = vrot.slane %v1482, 2
    %v1484 = vadd.f32 %v1482, %v1483
    %v1485 = vrot.slane %v1484, 1
    %v1486 = vadd.f32 %v1484, %v1485
    %v1487 = vrot.slane %v1480, 4
    %v1488 = vadd.f32 %v1480, %v1487
    %v1489 = vrot.slane %v1488, 2
    %v1490 = vadd.f32 %v1488, %v1489
    %v1491 = vrot.slane %v1490, 1
    %v1492 = vadd.f32 %v1490, %v1491
    %v1493 = vmul.f32 %v1486, %v735
    %v1494 = vmul.f32 %v1492, %v735
    %v1495 = vsub.f32 %v1479, %v1493
    %v1496 = vsub.f32 %v1480, %v1494
    %v1497 = vmul.f32 %v1495, %v1495
    %v1498 = vmul.f32 %v1496, %v1496
    %v1499 = vrot.slane %v1497, 4
    %v1500 = vadd.f32 %v1497, %v1499
    %v1501 = vrot.slane %v1500, 2
    %v1502 = vadd.f32 %v1500, %v1501
    %v1503 = vrot.slane %v1502, 1
    %v1504 = vadd.f32 %v1502, %v1503
    %v1505 = vrot.slane %v1498, 4
    %v1506 = vadd.f32 %v1498, %v1505
    %v1507 = vrot.slane %v1506, 2
    %v1508 = vadd.f32 %v1506, %v1507
    %v1509 = vrot.slane %v1508, 1
    %v1510 = vadd.f32 %v1508, %v1509
    %v1511 = vmul.f32 %v1504, %v735
    %v1512 = vmul.f32 %v1510, %v735
    %v1513 = vadd.f32 %v1511, 1e-05
    %v1514 = vadd.f32 %v1512, 1e-05
    %v1515 = vrsqrt.pop %v1513
    %v1516 = vrsqrt.pop %v1514
    %v1517 = vmul.f32 %v1495, %v1515
    %v1518 = vmul.f32 %v1496, %v1516
    %v1519 = vld [vmem:[%s16] sm:$0x1]
    %v1521 = vlaneseq
    %v1522 = vshrl.u32 %v1521, 7
    %v1523 = vsub.s32 0, %v1522
    %v1524 = vrot.slane %v1519, %v1523
    %v1526 = vmul.f32 %v1517, %v1524
    %v1527 = vmul.f32 %v1518, %v1524
    %v1528 = vld [vmem:[%s17] sm:$0x1]
    %v1530 = vlaneseq
    %v1531 = vshrl.u32 %v1530, 7
    %v1532 = vsub.s32 0, %v1531
    %v1533 = vrot.slane %v1528, %v1532
    %v1535 = vadd.f32 %v1526, %v1533
    %v1536 = vadd.f32 %v1527, %v1533
    %1537 = vst [vmem:[#allocation7] sm:$0xff] %v1535
    %1538 = vst [vmem:[#allocation7 + $0x8] sm:$0xff] %v1536
    // Predicated region
    $region82: #{mha_moe_layer_forward.1} parent=1 // pred_check
      _
    $region83: #{mha_moe_layer_forward.1} parent=1 // pred_check_branch
      %1540 = sbr.rel (0) target = $region85
    $region84: #{mha_moe_layer_forward.1} parent=1 // pred_region
      %s1542 = ssub.s32 256, 256
      %1543 = vsyncadd [#allocation4], %s1542
      %s1544 = sshll.u32 [#allocation7], 4
      %s1545 = int_to_ptr.vmem [resolvable:$true] %s1544
      %1550 = dma.vmem_to_hbm [thread:$0]  %s1545, 256, %s18, [#allocation4], 128, 128, 8
    $region85: #{mha_moe_layer_forward.1} parent=1 // pred_fallthru
      _
    // Predicated region
    $region86: #{mha_moe_layer_forward.1} parent=1 // pred_check
      _
    $region87: #{mha_moe_layer_forward.1} parent=1 // pred_check_branch
      %1552 = sbr.rel (0) target = $region89
    $region88: #{mha_moe_layer_forward.1} parent=1 // pred_region
      %1553 = dma.done [#allocation4], 256
    $region89: #{mha_moe_layer_forward.1} parent=1 // pred_fallthru
      _
    %1554 = vsyncpa [#allocation3], 1
    %1555 = vsyncpa [#allocation6], 1
    %1556 = vsyncpa [#allocation4], 1

</llo_original>
